<compile_context>
chip_gen: v7x
topology: tpu7x:2x2x1
jax: 0.10.0
libtpu: 0.0.40
codegen_flags: <defaults>
</compile_context>

<pallas_src>
import numpy as np
import jax
import jax.numpy as jnp
from jax.experimental import pallas as pl
from jax.experimental.pallas import tpu as pltpu

# ---------------- CONFIG (forward-relevant subset of MNIST_hx.CONFIG) --------
IMG_SIZE = (28, 28)
N_DIMS = IMG_SIZE[0] * IMG_SIZE[1]      # 784
SPLIT1 = N_DIMS // 2                    # 392 (GLOW split lengths are equal)
SPLIT2 = N_DIMS - SPLIT1                # 392
COND_DIM = 10
INTERNAL_WIDTH = 64                     # CONFIG.internal_width
CLAMP = 1.0                             # CONFIG.clamping
INIT_SCALE = 0.03                       # CONFIG.init_scale
N_BLOCKS = 20                           # CONFIG.n_blocks
INPUT_ACTIVATION_MAX = 31.0             # one_hot(label, scale=31.0)
RELU_SHIFT = 1                          # hxnn.ConvertingReLU(shift=1) -> relu(x)/2
SUBNET_IN = SPLIT1 + COND_DIM           # 402
SUBNET_OUT = 2 * SPLIT1                 # 784

MXU_DTYPE = jnp.bfloat16                # matmul operand dtype (f32 accumulation)
MAX_BATCH_TILE = 256                    # batch tile (multiple of 128; MXU-friendly)


# ---------------------------- Pallas kernel ----------------------------------
def _glow_block_kernel(x1_ref, x2_ref, b2_ref, b1_ref,
                       w1a_ref, w2sa_ref, w2ta_ref,
                       w1b_ref, w2sb_ref, w2tb_ref,
                       y1_ref, y2_ref, j_ref):
    """One full GLOW coupling block (both halves), scales pre-folded into weights.

       half 1: (s2,t2) = subnet2(x2, cond);  y1 = exp(s2)*x1 + t2
       half 2: (s1,t1) = subnet1(y1, cond);  y2 = exp(s1)*x2 + t1
       j = sum(s2) + sum(s1)   with s = CLAMP * sigmoid(logits)
    """
    x1 = x1_ref[...]
    x2 = x2_ref[...]

    # ---- half 1: subnet2 on x2 (cond enters as a precomputed f32 bias) ----
    h = jnp.dot(x2.astype(MXU_DTYPE), w1a_ref[...],
                preferred_element_type=jnp.float32)                 # (B, 64) MXU
    h = jnp.maximum(h + b2_ref[...], 0.0).astype(MXU_DTYPE)         # ReLU (shift/scales folded)
    s2 = CLAMP * jax.nn.sigmoid(
        jnp.dot(h, w2sa_ref[...], preferred_element_type=jnp.float32))   # (B, 392) f32
    t2 = jnp.dot(h, w2ta_ref[...], preferred_element_type=jnp.float32)   # (B, 392) f32
    y1 = jnp.exp(s2) * x1 + t2
    j = jnp.sum(s2, axis=-1, keepdims=True)

    # ---- half 2: subnet1 on y1 ----
    h2 = jnp.dot(y1.astype(MXU_DTYPE), w1b_ref[...],
                 preferred_element_type=jnp.float32)
    h2 = jnp.maximum(h2 + b1_ref[...], 0.0).astype(MXU_DTYPE)
    s1 = CLAMP * jax.nn.sigmoid(
        jnp.dot(h2, w2sb_ref[...], preferred_element_type=jnp.float32))
    t1 = jnp.dot(h2, w2tb_ref[...], preferred_element_type=jnp.float32)

    y1_ref[...] = y1
    y2_ref[...] = jnp.exp(s1) * x2 + t1
    j_ref[...] = j + jnp.sum(s1, axis=-1, keepdims=True)


def glow_block(x1, x2, b2, b1, wts):
    """Run one fused GLOW block. Batch is tiled over a 'parallel' grid axis;
    weights use a constant index_map so they stay VMEM-resident across tiles."""
    B = x1.shape[0]
    tile = B if B <= MAX_BATCH_TILE else MAX_BATCH_TILE
    pad = (-B) % tile
    if pad:
        _p = lambda a: jnp.pad(a, ((0, pad), (0, 0)))
        x1, x2, b2, b1 = _p(x1), _p(x2), _p(b2), _p(b1)
    Bp = B + pad
    grid = (Bp // tile,)

    def act_spec(feat):
        return pl.BlockSpec((tile, feat), lambda i: (i, 0))

    def weight_spec(w):
        return pl.BlockSpec(w.shape, lambda i: (0, 0))

    y1, y2, j = pl.pallas_call(
        _glow_block_kernel,
        grid=grid,
        in_specs=[act_spec(SPLIT1), act_spec(SPLIT2),
                  act_spec(INTERNAL_WIDTH), act_spec(INTERNAL_WIDTH)]
                 + [weight_spec(w) for w in wts],
        out_specs=[act_spec(SPLIT1), act_spec(SPLIT2), act_spec(1)],
        out_shape=[jax.ShapeDtypeStruct((Bp, SPLIT1), jnp.float32),
                   jax.ShapeDtypeStruct((Bp, SPLIT2), jnp.float32),
                   jax.ShapeDtypeStruct((Bp, 1), jnp.float32)],
        compiler_params=pltpu.CompilerParams(
            dimension_semantics=("parallel",)),     # v7x: shard batch over 2 TCs
    )(x1, x2, b2, b1, *wts)
    if pad:
        y1, y2, j = y1[:B], y2[:B], j[:B]
    return y1, y2, j[:, 0]


# --------------------------- parameters --------------------------------------
def init_params(key, n_blocks):
    """Deterministic synthetic parameters (shapes from MNISTcINN_hx.build_inn).

    All static per-feature scales are folded into the weights offline:
      first layer : w1x = diag(sin1_x) @ w1[:392]          (x-part, bf16)
                    cond_tab = 31 * diag(sin1_c) @ w1[392:]  (10,64 lookup, f32)
      second layer: w2_eff = diag(0.5**shift * sin2) @ w2 @ diag(sout)
                    split lane-aligned into w2s = w2_eff[:, :392], w2t = [:, 392:]
    """
    blocks = []
    for k in range(n_blocks):
        # Fm.PermuteRandom(seed=k): np.random.seed(k); permutation(784)
        perm = np.random.RandomState(k).permutation(N_DIMS).astype(np.int32)
        subnets = []
        for _ in range(2):  # subnet1 (y1->y2 half) and subnet2 (x2->y1 half)
            key, k1, k2, k3, k4, k5 = jax.random.split(key, 6)
            w1 = jax.random.normal(k1, (SUBNET_IN, INTERNAL_WIDTH), jnp.float32) * INIT_SCALE
            w2 = jax.random.normal(k2, (INTERNAL_WIDTH, SUBNET_OUT), jnp.float32) * INIT_SCALE
            sin1 = jax.random.uniform(k3, (SUBNET_IN,), jnp.float32, 0.5, 1.5)
            sin2 = jax.random.uniform(k4, (INTERNAL_WIDTH,), jnp.float32, 0.5, 1.5)
            sout = jax.random.uniform(k5, (SUBNET_OUT,), jnp.float32, 0.05, 0.15)
            w1_eff = sin1[:, None] * w1
            w1x = w1_eff[:SPLIT2, :].astype(MXU_DTYPE)                      # (392, 64)
            cond_tab = INPUT_ACTIVATION_MAX * w1_eff[SPLIT2:, :]            # (10, 64) f32
            w2_eff = (0.5 ** RELU_SHIFT) * sin2[:, None] * w2 * sout[None, :]
            w2s = w2_eff[:, :SPLIT1].astype(MXU_DTYPE)                      # (64, 392)
            w2t = w2_eff[:, SPLIT1:].astype(MXU_DTYPE)                      # (64, 392)
            subnets.append({"w1x": w1x, "w2s": w2s, "w2t": w2t, "cond_tab": cond_tab})
        blocks.append({"perm": jnp.asarray(perm),
                       "subnet1": subnets[0], "subnet2": subnets[1]})
    return {"blocks": blocks}


# ----------------------------- forward ----------------------------------------
def forward(params, x, label, jac=True):
    """x: (B, 1, 28, 28) NCHW float32, label: (B,) int. Returns (z, log_jac)."""
    B = x.shape[0]
    z = x.reshape(B, -1)                                   # Fm.Flatten (row-major)
    log_jac = jnp.zeros((B,), jnp.float32)
    for blk in params["blocks"]:
        z = z[:, blk["perm"]]                              # Fm.PermuteRandom, log|det|=0
        x1, x2 = z[:, :SPLIT1], z[:, SPLIT1:]
        sn2, sn1 = blk["subnet2"], blk["subnet1"]
        # one-hot cond contribution of the first linear layer == table lookup
        b2 = sn2["cond_tab"][label]                        # (B, 64) f32
        b1 = sn1["cond_tab"][label]                        # (B, 64) f32
        wts = (sn2["w1x"], sn2["w2s"], sn2["w2t"],
               sn1["w1x"], sn1["w2s"], sn1["w2t"])
        y1, y2, jb = glow_block(x1, x2, b2, b1, wts)
        z = jnp.concatenate([y1, y2], axis=1)
        log_jac = log_jac + jb
    return (z, log_jac) if jac else z


# -------------------- pure-JAX reference (same folded math) -------------------
def forward_ref(params, x, label):
    B = x.shape[0]
    z = x.reshape(B, -1)
    log_jac = jnp.zeros((B,), jnp.float32)
    for blk in params["blocks"]:
        z = z[:, blk["perm"]]
        x1, x2 = z[:, :SPLIT1], z[:, SPLIT1:]

        def half(xin, xo, sn):
            h = jnp.dot(xin.astype(MXU_DTYPE), sn["w1x"],
                        preferred_element_type=jnp.float32) + sn["cond_tab"][label]
            h = jnp.maximum(h, 0.0).astype(MXU_DTYPE)
            s = CLAMP * jax.nn.sigmoid(
                jnp.dot(h, sn["w2s"], preferred_element_type=jnp.float32))
            t = jnp.dot(h, sn["w2t"], preferred_element_type=jnp.float32)
            return jnp.exp(s) * xo + t, jnp.sum(s, axis=-1)

        y1, j1 = half(x2, x1, blk["subnet2"])
        y2, j2 = half(y1, x2, blk["subnet1"])
        z = jnp.concatenate([y1, y2], axis=1)
        log_jac = log_jac + j1 + j2
    return z, log_jac


# ------------------------------- demo -----------------------------------------
if __name__ == "__main__":
    key = jax.random.PRNGKey(0)
    kp, kx, kl = jax.random.split(key, 3)

    # CONFIG.n_blocks == 20; reduced block count for a small, fast demo.
    n_blocks = 4
    params = init_params(kp, n_blocks)

    B = 2
    x = jax.random.normal(kx, (B, 1, *IMG_SIZE), jnp.float32)
    label = jax.random.randint(kl, (B,), 0, 10)

    fwd = jax.jit(lambda xx, ll: forward(params, xx, ll, jac=True))
    z, log_jac = fwd(x, label)
    jax.block_until_ready((z, log_jac))

    z_ref, lj_ref = jax.jit(lambda xx, ll: forward_ref(params, xx, ll))(x, label)
    jax.block_until_ready((z_ref, lj_ref))

    assert z.shape == (B, N_DIMS), z.shape
    assert log_jac.shape == (B,), log_jac.shape
    assert bool(jnp.all(jnp.isfinite(z))) and bool(jnp.all(jnp.isfinite(log_jac)))
    np.testing.assert_allclose(np.asarray(z), np.asarray(z_ref), rtol=2e-2, atol=2e-2)
    np.testing.assert_allclose(np.asarray(log_jac), np.asarray(lj_ref), rtol=2e-2, atol=2e-2)
    print("KERNEL_OK")
</pallas_src>

<mosaic_0001>
module attributes {stable_mosaic.version = 11 : i64} {
  func.func @_glow_block_kernel(%arg0: i32, %arg1: memref<2x392xf32, #tpu.memory_space<vmem>>, %arg2: memref<2x392xf32, #tpu.memory_space<vmem>>, %arg3: memref<2x64xf32, #tpu.memory_space<vmem>>, %arg4: memref<2x64xf32, #tpu.memory_space<vmem>>, %arg5: memref<392x64xbf16, #tpu.memory_space<vmem>>, %arg6: memref<64x392xbf16, #tpu.memory_space<vmem>>, %arg7: memref<64x392xbf16, #tpu.memory_space<vmem>>, %arg8: memref<392x64xbf16, #tpu.memory_space<vmem>>, %arg9: memref<64x392xbf16, #tpu.memory_space<vmem>>, %arg10: memref<64x392xbf16, #tpu.memory_space<vmem>>, %arg11: memref<2x392xf32, #tpu.memory_space<vmem>>, %arg12: memref<2x392xf32, #tpu.memory_space<vmem>>, %arg13: memref<2x1xf32, #tpu.memory_space<vmem>>) attributes {dimension_semantics = [#tpu.dimension_semantics<parallel>], iteration_bounds = array<i64: 1>, scalar_prefetch = 0 : i64, scratch_operands = 0 : i64, tpu.core_type = #tpu.core_type<tc>, window_params = [{transform_indices = @transform_0, window_bounds = array<i64: 2, 392>}, {transform_indices = @transform_1, window_bounds = array<i64: 2, 392>}, {transform_indices = @transform_2, window_bounds = array<i64: 2, 64>}, {transform_indices = @transform_3, window_bounds = array<i64: 2, 64>}, {pipeline_mode = #tpu.pipeline_mode<synchronous>, transform_indices = @transform_4, window_bounds = array<i64: 392, 64>}, {pipeline_mode = #tpu.pipeline_mode<synchronous>, transform_indices = @transform_5, window_bounds = array<i64: 64, 392>}, {pipeline_mode = #tpu.pipeline_mode<synchronous>, transform_indices = @transform_6, window_bounds = array<i64: 64, 392>}, {pipeline_mode = #tpu.pipeline_mode<synchronous>, transform_indices = @transform_7, window_bounds = array<i64: 392, 64>}, {pipeline_mode = #tpu.pipeline_mode<synchronous>, transform_indices = @transform_8, window_bounds = array<i64: 64, 392>}, {pipeline_mode = #tpu.pipeline_mode<synchronous>, transform_indices = @transform_9, window_bounds = array<i64: 64, 392>}, {transform_indices = @transform_10, window_bounds = array<i64: 2, 392>}, {transform_indices = @transform_11, window_bounds = array<i64: 2, 392>}, {transform_indices = @transform_12, window_bounds = array<i64: 2, 1>}]} {
    %c0 = arith.constant 0 : index
    %c0_0 = arith.constant 0 : index
    %0 = vector.load %arg1[%c0, %c0_0] : memref<2x392xf32, #tpu.memory_space<vmem>>, vector<2x392xf32>
    %c0_1 = arith.constant 0 : index
    %c0_2 = arith.constant 0 : index
    %1 = vector.load %arg2[%c0_1, %c0_2] : memref<2x392xf32, #tpu.memory_space<vmem>>, vector<2x392xf32>
    %2 = arith.truncf %1 : vector<2x392xf32> to vector<2x392xbf16>
    %c0_3 = arith.constant 0 : index
    %c0_4 = arith.constant 0 : index
    %3 = vector.load %arg5[%c0_3, %c0_4] : memref<392x64xbf16, #tpu.memory_space<vmem>>, vector<392x64xbf16>
    %cst = arith.constant dense<0.000000e+00> : vector<2x64xf32>
    %4 = tpu.matmul %2, %3, %cst {dimension_numbers = #tpu.dot_dimension_numbers<[1], [0], [0], [1], [0, 0, 1, 1], [], []>} : vector<2x392xbf16>, vector<392x64xbf16>, vector<2x64xf32> -> vector<2x64xf32>
    %c0_5 = arith.constant 0 : index
    %c0_6 = arith.constant 0 : index
    %5 = vector.load %arg3[%c0_5, %c0_6] : memref<2x64xf32, #tpu.memory_space<vmem>>, vector<2x64xf32>
    %6 = arith.addf %4, %5 : vector<2x64xf32>
    %cst_7 = arith.constant 0.000000e+00 : f32
    %7 = vector.broadcast %cst_7 : f32 to vector<2x64xf32>
    %8 = arith.maximumf %6, %7 : vector<2x64xf32>
    %9 = arith.truncf %8 : vector<2x64xf32> to vector<2x64xbf16>
    %c0_8 = arith.constant 0 : index
    %c0_9 = arith.constant 0 : index
    %10 = vector.load %arg6[%c0_8, %c0_9] : memref<64x392xbf16, #tpu.memory_space<vmem>>, vector<64x392xbf16>
    %cst_10 = arith.constant dense<0.000000e+00> : vector<2x392xf32>
    %11 = tpu.matmul %9, %10, %cst_10 {dimension_numbers = #tpu.dot_dimension_numbers<[1], [0], [0], [1], [0, 0, 1, 1], [], []>} : vector<2x64xbf16>, vector<64x392xbf16>, vector<2x392xf32> -> vector<2x392xf32>
    %12 = arith.negf %11 : vector<2x392xf32>
    %13 = math.exp %12 : vector<2x392xf32>
    %cst_11 = arith.constant 1.000000e+00 : f32
    %14 = vector.broadcast %cst_11 : f32 to vector<2x392xf32>
    %15 = arith.addf %14, %13 : vector<2x392xf32>
    %16 = arith.divf %14, %15 : vector<2x392xf32>
    %cst_12 = arith.constant 1.000000e+00 : f32
    %17 = vector.broadcast %cst_12 : f32 to vector<2x392xf32>
    %18 = arith.mulf %17, %16 : vector<2x392xf32>
    %c0_13 = arith.constant 0 : index
    %c0_14 = arith.constant 0 : index
    %19 = vector.load %arg7[%c0_13, %c0_14] : memref<64x392xbf16, #tpu.memory_space<vmem>>, vector<64x392xbf16>
    %cst_15 = arith.constant dense<0.000000e+00> : vector<2x392xf32>
    %20 = tpu.matmul %9, %19, %cst_15 {dimension_numbers = #tpu.dot_dimension_numbers<[1], [0], [0], [1], [0, 0, 1, 1], [], []>} : vector<2x64xbf16>, vector<64x392xbf16>, vector<2x392xf32> -> vector<2x392xf32>
    %21 = math.exp %18 : vector<2x392xf32>
    %22 = arith.mulf %21, %0 : vector<2x392xf32>
    %23 = arith.addf %22, %20 : vector<2x392xf32>
    %cst_16 = arith.constant dense<0.000000e+00> : vector<2xf32>
    %24 = vector.multi_reduction <add>, %18, %cst_16 [1] : vector<2x392xf32> to vector<2xf32>
    %25 = vector.shape_cast %24 : vector<2xf32> to vector<2x1xf32>
    %26 = arith.truncf %23 : vector<2x392xf32> to vector<2x392xbf16>
    %c0_17 = arith.constant 0 : index
    %c0_18 = arith.constant 0 : index
    %27 = vector.load %arg8[%c0_17, %c0_18] : memref<392x64xbf16, #tpu.memory_space<vmem>>, vector<392x64xbf16>
    %cst_19 = arith.constant dense<0.000000e+00> : vector<2x64xf32>
    %28 = tpu.matmul %26, %27, %cst_19 {dimension_numbers = #tpu.dot_dimension_numbers<[1], [0], [0], [1], [0, 0, 1, 1], [], []>} : vector<2x392xbf16>, vector<392x64xbf16>, vector<2x64xf32> -> vector<2x64xf32>
    %c0_20 = arith.constant 0 : index
    %c0_21 = arith.constant 0 : index
    %29 = vector.load %arg4[%c0_20, %c0_21] : memref<2x64xf32, #tpu.memory_space<vmem>>, vector<2x64xf32>
    %30 = arith.addf %28, %29 : vector<2x64xf32>
    %cst_22 = arith.constant 0.000000e+00 : f32
    %31 = vector.broadcast %cst_22 : f32 to vector<2x64xf32>
    %32 = arith.maximumf %30, %31 : vector<2x64xf32>
    %33 = arith.truncf %32 : vector<2x64xf32> to vector<2x64xbf16>
    %c0_23 = arith.constant 0 : index
    %c0_24 = arith.constant 0 : index
    %34 = vector.load %arg9[%c0_23, %c0_24] : memref<64x392xbf16, #tpu.memory_space<vmem>>, vector<64x392xbf16>
    %cst_25 = arith.constant dense<0.000000e+00> : vector<2x392xf32>
    %35 = tpu.matmul %33, %34, %cst_25 {dimension_numbers = #tpu.dot_dimension_numbers<[1], [0], [0], [1], [0, 0, 1, 1], [], []>} : vector<2x64xbf16>, vector<64x392xbf16>, vector<2x392xf32> -> vector<2x392xf32>
    %36 = arith.negf %35 : vector<2x392xf32>
    %37 = math.exp %36 : vector<2x392xf32>
    %cst_26 = arith.constant 1.000000e+00 : f32
    %38 = vector.broadcast %cst_26 : f32 to vector<2x392xf32>
    %39 = arith.addf %38, %37 : vector<2x392xf32>
    %40 = arith.divf %38, %39 : vector<2x392xf32>
    %cst_27 = arith.constant 1.000000e+00 : f32
    %41 = vector.broadcast %cst_27 : f32 to vector<2x392xf32>
    %42 = arith.mulf %41, %40 : vector<2x392xf32>
    %c0_28 = arith.constant 0 : index
    %c0_29 = arith.constant 0 : index
    %43 = vector.load %arg10[%c0_28, %c0_29] : memref<64x392xbf16, #tpu.memory_space<vmem>>, vector<64x392xbf16>
    %cst_30 = arith.constant dense<0.000000e+00> : vector<2x392xf32>
    %44 = tpu.matmul %33, %43, %cst_30 {dimension_numbers = #tpu.dot_dimension_numbers<[1], [0], [0], [1], [0, 0, 1, 1], [], []>} : vector<2x64xbf16>, vector<64x392xbf16>, vector<2x392xf32> -> vector<2x392xf32>
    %c0_31 = arith.constant 0 : index
    %c0_32 = arith.constant 0 : index
    %45 = vector.load %arg11[%c0_31, %c0_32] : memref<2x392xf32, #tpu.memory_space<vmem>>, vector<2x392xf32>
    tpu.vector_store %arg11[%c0_31, %c0_32], %23 {strides = array<i32>} : memref<2x392xf32, #tpu.memory_space<vmem>>, vector<2x392xf32>,
    %46 = math.exp %42 : vector<2x392xf32>
    %47 = arith.mulf %46, %1 : vector<2x392xf32>
    %48 = arith.addf %47, %44 : vector<2x392xf32>
    %c0_33 = arith.constant 0 : index
    %c0_34 = arith.constant 0 : index
    %49 = vector.load %arg12[%c0_33, %c0_34] : memref<2x392xf32, #tpu.memory_space<vmem>>, vector<2x392xf32>
    tpu.vector_store %arg12[%c0_33, %c0_34], %48 {strides = array<i32>} : memref<2x392xf32, #tpu.memory_space<vmem>>, vector<2x392xf32>,
    %cst_35 = arith.constant dense<0.000000e+00> : vector<2xf32>
    %50 = vector.multi_reduction <add>, %42, %cst_35 [1] : vector<2x392xf32> to vector<2xf32>
    %51 = vector.shape_cast %50 : vector<2xf32> to vector<2x1xf32>
    %52 = arith.addf %25, %51 : vector<2x1xf32>
    %c0_36 = arith.constant 0 : index
    %c0_37 = arith.constant 0 : index
    %53 = vector.load %arg13[%c0_36, %c0_37] : memref<2x1xf32, #tpu.memory_space<vmem>>, vector<2x1xf32>
    tpu.vector_store %arg13[%c0_36, %c0_37], %52 {strides = array<i32>} : memref<2x1xf32, #tpu.memory_space<vmem>>, vector<2x1xf32>,
    return
  }
  func.func @transform_0(%arg0: i32) -> (i32, i32) {
    %c0_i32 = arith.constant 0 : i32
    %c0_i32_0 = arith.constant 0 : i32
    return %arg0, %c0_i32 : i32, i32
  }
  func.func @transform_1(%arg0: i32) -> (i32, i32) {
    %c0_i32 = arith.constant 0 : i32
    %c0_i32_0 = arith.constant 0 : i32
    return %arg0, %c0_i32 : i32, i32
  }
  func.func @transform_2(%arg0: i32) -> (i32, i32) {
    %c0_i32 = arith.constant 0 : i32
    %c0_i32_0 = arith.constant 0 : i32
    return %arg0, %c0_i32 : i32, i32
  }
  func.func @transform_3(%arg0: i32) -> (i32, i32) {
    %c0_i32 = arith.constant 0 : i32
    %c0_i32_0 = arith.constant 0 : i32
    return %arg0, %c0_i32 : i32, i32
  }
  func.func @transform_4(%arg0: i32) -> (i32, i32) {
    %c0_i32 = arith.constant 0 : i32
    %c0_i32_0 = arith.constant 0 : i32
    %c0_i32_1 = arith.constant 0 : i32
    return %c0_i32, %c0_i32_0 : i32, i32
  }
  func.func @transform_5(%arg0: i32) -> (i32, i32) {
    %c0_i32 = arith.constant 0 : i32
    %c0_i32_0 = arith.constant 0 : i32
    %c0_i32_1 = arith.constant 0 : i32
    return %c0_i32, %c0_i32_0 : i32, i32
  }
  func.func @transform_6(%arg0: i32) -> (i32, i32) {
    %c0_i32 = arith.constant 0 : i32
    %c0_i32_0 = arith.constant 0 : i32
    %c0_i32_1 = arith.constant 0 : i32
    return %c0_i32, %c0_i32_0 : i32, i32
  }
  func.func @transform_7(%arg0: i32) -> (i32, i32) {
    %c0_i32 = arith.constant 0 : i32
    %c0_i32_0 = arith.constant 0 : i32
    %c0_i32_1 = arith.constant 0 : i32
    return %c0_i32, %c0_i32_0 : i32, i32
  }
  func.func @transform_8(%arg0: i32) -> (i32, i32) {
    %c0_i32 = arith.constant 0 : i32
    %c0_i32_0 = arith.constant 0 : i32
    %c0_i32_1 = arith.constant 0 : i32
    return %c0_i32, %c0_i32_0 : i32, i32
  }
  func.func @transform_9(%arg0: i32) -> (i32, i32) {
    %c0_i32 = arith.constant 0 : i32
    %c0_i32_0 = arith.constant 0 : i32
    %c0_i32_1 = arith.constant 0 : i32
    return %c0_i32, %c0_i32_0 : i32, i32
  }
  func.func @transform_10(%arg0: i32) -> (i32, i32) {
    %c0_i32 = arith.constant 0 : i32
    %c0_i32_0 = arith.constant 0 : i32
    return %arg0, %c0_i32 : i32, i32
  }
  func.func @transform_11(%arg0: i32) -> (i32, i32) {
    %c0_i32 = arith.constant 0 : i32
    %c0_i32_0 = arith.constant 0 : i32
    return %arg0, %c0_i32 : i32, i32
  }
  func.func @transform_12(%arg0: i32) -> (i32, i32) {
    %c0_i32 = arith.constant 0 : i32
    %c0_i32_0 = arith.constant 0 : i32
    return %arg0, %c0_i32 : i32, i32
  }
}

</mosaic_0001>

<llo_original>
// kernel: _lambda_.4
$region0: #{_lambda_.4}
  #allocation0 [shape = 'u32[]', space=smem, size = 0x4, offset = 0x4, fixed_abs, tag = 'smem constant byte address 0x4 - core index']
  #allocation1 [shape = 'u32[144,128]{1,0:T(1,128)}', space=vmem, size = 0x12000, scoped, tag = 'internal scratch']
  %s0 = inlined_call_operand.vmem [shape: f32[2,392], index: 0, kind: input, shape index: {}]
  %s1 = inlined_call_operand.vmem [shape: f32[2,392], index: 1, kind: input, shape index: {}]
  %s2 = inlined_call_operand.vmem [shape: f32[2,64], index: 2, kind: input, shape index: {}]
  %s3 = inlined_call_operand.vmem [shape: f32[2,64], index: 3, kind: input, shape index: {}]
  %s4 = inlined_call_operand.vmem [shape: bf16[392,64], index: 4, kind: input, shape index: {}]
  %s5 = inlined_call_operand.vmem [shape: bf16[64,392], index: 5, kind: input, shape index: {}]
  %s6 = inlined_call_operand.vmem [shape: bf16[64,392], index: 6, kind: input, shape index: {}]
  %s7 = inlined_call_operand.vmem [shape: bf16[392,64], index: 7, kind: input, shape index: {}]
  %s8 = inlined_call_operand.vmem [shape: bf16[64,392], index: 8, kind: input, shape index: {}]
  %s9 = inlined_call_operand.vmem [shape: bf16[64,392], index: 9, kind: input, shape index: {}]
  %s10 = inlined_call_operand.vmem [shape: f32[2,392], index: 10, kind: output, shape index: {0}]
  %s11 = inlined_call_operand.vmem [shape: f32[2,392], index: 11, kind: output, shape index: {1}]
  %s12 = inlined_call_operand.vmem [shape: f32[2,1], index: 12, kind: output, shape index: {2}]
  %13 = xla_tuple %s10, %s11, %s12
  %s14 = sld [smem:[#allocation0]]
  $region66: #{_lambda_.4} parent=0
    _
  %s16 = ssub.s32 1, %s14
  %s17 = scalar_select 0, %s16, %s14
  // Predicated region
  $region2: #{_lambda_.4} parent=0 // pred_check
    _
  $region3: #{_lambda_.4} parent=0 // pred_check_branch
    %19 = sbr.rel (0) target = $region5
  $region4: #{_lambda_.4} parent=0 // pred_region
    _
  $region5: #{_lambda_.4} parent=0 // pred_fallthru
    _
  // Predicated region
  $region6: #{_lambda_.4} parent=0 // pred_check
    _
  $region7: #{_lambda_.4} parent=0 // pred_check_branch
    %21 = sbr.rel (0) target = $region9
  $region8: #{_lambda_.4} parent=0 // pred_region
    _
  $region9: #{_lambda_.4} parent=0 // pred_fallthru
    _
  // Predicated region
  $region10: #{_lambda_.4} parent=0 // pred_check
    _
  $region11: #{_lambda_.4} parent=0 // pred_check_branch
    %23 = sbr.rel (0) target = $region13
  $region12: #{_lambda_.4} parent=0 // pred_region
    _
  $region13: #{_lambda_.4} parent=0 // pred_fallthru
    _
  // Predicated region
  $region14: #{_lambda_.4} parent=0 // pred_check
    _
  $region15: #{_lambda_.4} parent=0 // pred_check_branch
    %25 = sbr.rel (0) target = $region17
  $region16: #{_lambda_.4} parent=0 // pred_region
    _
  $region17: #{_lambda_.4} parent=0 // pred_fallthru
    _
  // Predicated region
  $region18: #{_lambda_.4} parent=0 // pred_check
    _
  $region19: #{_lambda_.4} parent=0 // pred_check_branch
    %27 = sbr.rel (0) target = $region21
  $region20: #{_lambda_.4} parent=0 // pred_region
    _
  $region21: #{_lambda_.4} parent=0 // pred_fallthru
    _
  // Predicated region
  $region22: #{_lambda_.4} parent=0 // pred_check
    _
  $region23: #{_lambda_.4} parent=0 // pred_check_branch
    %29 = sbr.rel (0) target = $region25
  $region24: #{_lambda_.4} parent=0 // pred_region
    _
  $region25: #{_lambda_.4} parent=0 // pred_fallthru
    _
  // Predicated region
  $region26: #{_lambda_.4} parent=0 // pred_check
    _
  $region27: #{_lambda_.4} parent=0 // pred_check_branch
    %31 = sbr.rel (0) target = $region29
  $region28: #{_lambda_.4} parent=0 // pred_region
    _
  $region29: #{_lambda_.4} parent=0 // pred_fallthru
    _
  // Predicated region
  $region30: #{_lambda_.4} parent=0 // pred_check
    _
  $region31: #{_lambda_.4} parent=0 // pred_check_branch
    %33 = sbr.rel (0) target = $region33
  $region32: #{_lambda_.4} parent=0 // pred_region
    _
  $region33: #{_lambda_.4} parent=0 // pred_fallthru
    _
  // Predicated region
  $region34: #{_lambda_.4} parent=0 // pred_check
    _
  $region35: #{_lambda_.4} parent=0 // pred_check_branch
    %35 = sbr.rel (0) target = $region37
  $region36: #{_lambda_.4} parent=0 // pred_region
    _
  $region37: #{_lambda_.4} parent=0 // pred_fallthru
    _
  // Predicated region
  $region38: #{_lambda_.4} parent=0 // pred_check
    _
  $region39: #{_lambda_.4} parent=0 // pred_check_branch
    %37 = sbr.rel (0) target = $region41
  $region40: #{_lambda_.4} parent=0 // pred_region
    _
  $region41: #{_lambda_.4} parent=0 // pred_fallthru
    _
  %v39 = vld [vmem:[%s0] sm:$0xff]
  %v40 = vld [vmem:[%s1] sm:$0xff]
  %v42 = vcombine.high %v40, %v40
  %v44 = vunpack.c.l.s4 1983009808
  %v45 = vunpack.c.0.s8 %v44
  %v46 = vlaneseq
  %v47 = vshrl.u32 %v46, 7
  %v48 = vsub.s32 %v45, %v47
  %v49 = vrot.slane %v40, %v48
  %v51 = vunpack.c.l.s4 1983009808
  %v52 = vunpack.c.0.s8 %v51
  %v53 = vlaneseq
  %v54 = vshrl.u32 %v53, 7
  %v55 = vsub.s32 %v52, %v54
  %v56 = vrot.slane %v42, %v55
  %v57 = vcombine.high %v49, %v49
  %v58 = vcombine.high %v56, %v56
  %v63 = vpack.c.bf16 %v49, %v49
  %v64 = vpack.c.bf16 %v57, %v57
  %v65 = vpack.c.bf16 %v56, %v56
  %v66 = vpack.c.bf16 %v58, %v58
  %v67 = vld [vmem:[%s4] sm:$0xf]
  %v68 = vld [vmem:[%s4 + $0x4] sm:$0xf]
  %v69 = vld [vmem:[%s4 + $0x8] sm:$0xf]
  %v70 = vld [vmem:[%s4 + $0xc] sm:$0xf]
  %v71 = vld [vmem:[%s4 + $0x10] sm:$0xf]
  %v72 = vld [vmem:[%s4 + $0x14] sm:$0xf]
  %v73 = vld [vmem:[%s4 + $0x18] sm:$0xf]
  %v74 = vld [vmem:[%s4 + $0x1c] sm:$0xf]
  %v75 = vld [vmem:[%s4 + $0x20] sm:$0xf]
  %v76 = vld [vmem:[%s4 + $0x24] sm:$0xf]
  %v77 = vld [vmem:[%s4 + $0x28] sm:$0xf]
  %v78 = vld [vmem:[%s4 + $0x2c] sm:$0xf]
  %v79 = vld [vmem:[%s4 + $0x30] sm:$0xf]
  %v80 = vld [vmem:[%s4 + $0x34] sm:$0xf]
  %v81 = vld [vmem:[%s4 + $0x38] sm:$0xf]
  %v82 = vld [vmem:[%s4 + $0x3c] sm:$0xf]
  %v83 = vld [vmem:[%s4 + $0x40] sm:$0xf]
  %v84 = vld [vmem:[%s4 + $0x44] sm:$0xf]
  %v85 = vld [vmem:[%s4 + $0x48] sm:$0xf]
  %v86 = vld [vmem:[%s4 + $0x4c] sm:$0xf]
  %v87 = vld [vmem:[%s4 + $0x50] sm:$0xf]
  %v88 = vld [vmem:[%s4 + $0x54] sm:$0xf]
  %v89 = vld [vmem:[%s4 + $0x58] sm:$0xf]
  %v90 = vld [vmem:[%s4 + $0x5c] sm:$0xf]
  %v91 = vld [vmem:[%s4 + $0x60] sm:$0xf]
  %v92 = vld [vmem:[%s4 + $0x64] sm:$0xf]
  %v93 = vld [vmem:[%s4 + $0x68] sm:$0xf]
  %v94 = vld [vmem:[%s4 + $0x6c] sm:$0xf]
  %v95 = vld [vmem:[%s4 + $0x70] sm:$0xf]
  %v96 = vld [vmem:[%s4 + $0x74] sm:$0xf]
  %v97 = vld [vmem:[%s4 + $0x78] sm:$0xf]
  %v98 = vld [vmem:[%s4 + $0x7c] sm:$0xf]
  %v99 = vld [vmem:[%s4 + $0x80] sm:$0xf]
  %v100 = vld [vmem:[%s4 + $0x84] sm:$0xf]
  %v101 = vld [vmem:[%s4 + $0x88] sm:$0xf]
  %v102 = vld [vmem:[%s4 + $0x8c] sm:$0xf]
  %v103 = vld [vmem:[%s4 + $0x90] sm:$0xf]
  %v104 = vld [vmem:[%s4 + $0x94] sm:$0xf]
  %v105 = vld [vmem:[%s4 + $0x98] sm:$0xf]
  %v106 = vld [vmem:[%s4 + $0x9c] sm:$0xf]
  %v107 = vld [vmem:[%s4 + $0xa0] sm:$0xf]
  %v108 = vld [vmem:[%s4 + $0xa4] sm:$0xf]
  %v109 = vld [vmem:[%s4 + $0xa8] sm:$0xf]
  %v110 = vld [vmem:[%s4 + $0xac] sm:$0xf]
  %v111 = vld [vmem:[%s4 + $0xb0] sm:$0xf]
  %v112 = vld [vmem:[%s4 + $0xb4] sm:$0xf]
  %v113 = vld [vmem:[%s4 + $0xb8] sm:$0xf]
  %v114 = vld [vmem:[%s4 + $0xbc] sm:$0xf]
  %v115 = vld [vmem:[%s4 + $0xc0] sm:$0xf]
  %v116 = vld [vmem:[%s2] sm:$0x3]
  %v166 = vunpack.c.l.b16 %v67
  %v167 = vunpack.c.l.b16 %v68
  %v168 = vunpack.c.l.b16 %v69
  %v169 = vunpack.c.l.b16 %v70
  %v170 = vunpack.c.l.b16 %v71
  %v171 = vunpack.c.l.b16 %v72
  %v172 = vunpack.c.l.b16 %v73
  %v173 = vunpack.c.l.b16 %v74
  %v174 = vunpack.c.l.b16 %v75
  %v175 = vunpack.c.l.b16 %v76
  %v176 = vunpack.c.l.b16 %v77
  %v177 = vunpack.c.l.b16 %v78
  %v178 = vunpack.c.l.b16 %v79
  %v179 = vunpack.c.l.b16 %v80
  %v180 = vunpack.c.l.b16 %v81
  %v181 = vunpack.c.l.b16 %v82
  %v182 = vunpack.c.l.b16 %v83
  %v183 = vunpack.c.l.b16 %v84
  %v184 = vunpack.c.l.b16 %v85
  %v185 = vunpack.c.l.b16 %v86
  %v186 = vunpack.c.l.b16 %v87
  %v187 = vunpack.c.l.b16 %v88
  %v188 = vunpack.c.l.b16 %v89
  %v189 = vunpack.c.l.b16 %v90
  %v190 = vunpack.c.l.b16 %v91
  %v191 = vunpack.c.l.b16 %v92
  %v192 = vunpack.c.l.b16 %v93
  %v193 = vunpack.c.l.b16 %v94
  %v194 = vunpack.c.l.b16 %v95
  %v195 = vunpack.c.l.b16 %v96
  %v196 = vunpack.c.l.b16 %v97
  %v197 = vunpack.c.l.b16 %v98
  %v198 = vunpack.c.l.b16 %v99
  %v199 = vunpack.c.l.b16 %v100
  %v200 = vunpack.c.l.b16 %v101
  %v201 = vunpack.c.l.b16 %v102
  %v202 = vunpack.c.l.b16 %v103
  %v203 = vunpack.c.l.b16 %v104
  %v204 = vunpack.c.l.b16 %v105
  %v205 = vunpack.c.l.b16 %v106
  %v206 = vunpack.c.l.b16 %v107
  %v207 = vunpack.c.l.b16 %v108
  %v208 = vunpack.c.l.b16 %v109
  %v209 = vunpack.c.l.b16 %v110
  %v210 = vunpack.c.l.b16 %v111
  %v211 = vunpack.c.l.b16 %v112
  %v212 = vunpack.c.l.b16 %v113
  %v213 = vunpack.c.l.b16 %v114
  %v214 = vunpack.c.l.b16 %v115
  %v215 = vpack.c.b16 %v167, %v166
  %v216 = vpack.c.b16 %v169, %v168
  %v217 = vpack.c.b16 %v171, %v170
  %v218 = vpack.c.b16 %v173, %v172
  %v219 = vpack.c.b16 %v175, %v174
  %v220 = vpack.c.b16 %v177, %v176
  %v221 = vpack.c.b16 %v179, %v178
  %v222 = vpack.c.b16 %v181, %v180
  %v223 = vpack.c.b16 %v183, %v182
  %v224 = vpack.c.b16 %v185, %v184
  %v225 = vpack.c.b16 %v187, %v186
  %v226 = vpack.c.b16 %v189, %v188
  %v227 = vpack.c.b16 %v191, %v190
  %v228 = vpack.c.b16 %v193, %v192
  %v229 = vpack.c.b16 %v195, %v194
  %v230 = vpack.c.b16 %v197, %v196
  %v231 = vpack.c.b16 %v199, %v198
  %v232 = vpack.c.b16 %v201, %v200
  %v233 = vpack.c.b16 %v203, %v202
  %v234 = vpack.c.b16 %v205, %v204
  %v235 = vpack.c.b16 %v207, %v206
  %v236 = vpack.c.b16 %v209, %v208
  %v237 = vpack.c.b16 %v211, %v210
  %v238 = vpack.c.b16 %v213, %v212
  %v239 = vpack.c.b16 %v214, %v214
  %vm264 = vcmask 64512
  %v266 = vsel %vm264, %v66, 0
  %vm268 = vcmask 1043456
  %v270 = vsel %vm268, %v239, 0
  %272 = vmatprep.subr.bf16.mxu0 0
  %273 = vmatpush1.bf16.msra.mxu0 %v215
  %274 = vmatprep.subr.bf16.mxu0 0
  %275 = vmatpush1.bf16.msra.mxu0 %v216
  %276 = vmatprep.subr.bf16.mxu0 0
  %277 = vmatpush1.bf16.msra.mxu0 %v217
  %278 = vmatprep.subr.bf16.mxu0 0
  %279 = vmatpush1.bf16.msra.mxu0 %v218
  %280 = vmatprep.subr.bf16.mxu0 0
  %281 = vmatpush1.bf16.msra.mxu0 %v219
  %282 = vmatprep.subr.bf16.mxu0 0
  %283 = vmatpush1.bf16.msra.mxu0 %v220
  %284 = vmatprep.subr.bf16.mxu0 0
  %285 = vmatpush1.bf16.msra.mxu0 %v221
  %286 = vmatprep.subr.bf16.mxu0 0
  %287 = vmatpush1.bf16.msra.mxu0 %v222
  %288 = vmatprep.subr.bf16.mxu0 0
  %289 = vmatpush1.bf16.msra.mxu0 %v223
  %290 = vmatprep.subr.bf16.mxu0 0
  %291 = vmatpush1.bf16.msra.mxu0 %v224
  %292 = vmatprep.subr.bf16.mxu0 0
  %293 = vmatpush1.bf16.msra.mxu0 %v225
  %294 = vmatprep.subr.bf16.mxu0 0
  %295 = vmatpush1.bf16.msra.mxu0 %v226
  %296 = vmatprep.subr.bf16.mxu0 0
  %297 = vmatpush1.bf16.msra.mxu0 %v227
  %298 = vmatprep.subr.bf16.mxu0 0
  %299 = vmatpush1.bf16.msra.mxu0 %v228
  %300 = vmatprep.subr.bf16.mxu0 0
  %301 = vmatpush1.bf16.msra.mxu0 %v229
  %302 = vmatprep.subr.bf16.mxu0 0
  %303 = vmatpush1.bf16.msra.mxu0 %v230
  %304 = vmatprep.mubr.bf16.mxu0 %v64
  %305 = vmatmul.mubr.bf16.gmra.mrb[0].mxu0 %v63
  %v306 = vpop.f32.mrb[0].mxu0
  %v307 = vadd.f32 %v116, %v306
  %v308 = vpop.f32.mrb[0].mxu0
  %v309 = vpop.f32.mrb[0].mxu0
  %v310 = vpop.f32.mrb[0].mxu0
  %311 = vdwg.mxu0
  %312 = vmatprep.subr.bf16.mxu0 0
  %313 = vmatpush1.bf16.msra.mxu0 %v231
  %314 = vmatprep.subr.bf16.mxu0 0
  %315 = vmatpush1.bf16.msra.mxu0 %v232
  %316 = vmatprep.subr.bf16.mxu0 0
  %317 = vmatpush1.bf16.msra.mxu0 %v233
  %318 = vmatprep.subr.bf16.mxu0 0
  %319 = vmatpush1.bf16.msra.mxu0 %v234
  %320 = vmatprep.subr.bf16.mxu0 0
  %321 = vmatpush1.bf16.msra.mxu0 %v235
  %322 = vmatprep.subr.bf16.mxu0 0
  %323 = vmatpush1.bf16.msra.mxu0 %v236
  %324 = vmatprep.subr.bf16.mxu0 0
  %325 = vmatpush1.bf16.msra.mxu0 %v237
  %326 = vmatprep.subr.bf16.mxu0 0
  %327 = vmatpush1.bf16.msra.mxu0 %v238
  %328 = vmatprep.subr.bf16.mxu0 0
  %329 = vmatpush1.bf16.msra.mxu0 %v270
  %330 = vmatprep.subr.bf16.mxu0 0
  %331 = vmatpush1.bf16.msra.mxu0 0
  %332 = vmatprep.subr.bf16.mxu0 0
  %333 = vmatpush1.bf16.msra.mxu0 0
  %334 = vmatprep.subr.bf16.mxu0 0
  %335 = vmatpush1.bf16.msra.mxu0 0
  %336 = vmatprep.subr.bf16.mxu0 0
  %337 = vmatpush1.bf16.msra.mxu0 0
  %338 = vmatprep.subr.bf16.mxu0 0
  %339 = vmatpush1.bf16.msra.mxu0 0
  %340 = vmatprep.subr.bf16.mxu0 0
  %341 = vmatpush1.bf16.msra.mxu0 0
  %342 = vmatprep.subr.bf16.mxu0 0
  %343 = vmatpush1.bf16.msra.mxu0 0
  %344 = vmatprep.mubr.bf16.mxu0 %v266
  %345 = vmatmul.mubr.bf16.gmra.mrb[0].mxu0 %v65
  %v346 = vpop.f32.mrb[0].mxu0
  %v347 = vadd.f32 %v307, %v346
  %v348 = vpop.f32.mrb[0].mxu0
  %v349 = vpop.f32.mrb[0].mxu0
  %v350 = vpop.f32.mrb[0].mxu0
  %351 = vdwg.mxu0
  %v352 = vmax.f32 %v347, 0.0
  %v353 = vpack.c.bf16 %v352, %v352
  %v354 = vld [vmem:[%s5] sm:$0xff]
  %v355 = vld [vmem:[%s5 + $0x8] sm:$0xff]
  %v356 = vld [vmem:[%s5 + $0x10] sm:$0xff]
  %v357 = vld [vmem:[%s5 + $0x18] sm:$0xff]
  %v358 = vld [vmem:[%s5 + $0x20] sm:$0xff]
  %v359 = vld [vmem:[%s5 + $0x28] sm:$0xff]
  %v360 = vld [vmem:[%s5 + $0x30] sm:$0xff]
  %v361 = vld [vmem:[%s5 + $0x38] sm:$0xff]
  %v362 = vld [vmem:[%s5 + $0x40] sm:$0xff]
  %v363 = vld [vmem:[%s5 + $0x48] sm:$0xff]
  %v364 = vld [vmem:[%s5 + $0x50] sm:$0xff]
  %v365 = vld [vmem:[%s5 + $0x58] sm:$0xff]
  %v366 = vld [vmem:[%s5 + $0x60] sm:$0xff]
  %v367 = vld [vmem:[%s5 + $0x68] sm:$0xff]
  %v368 = vld [vmem:[%s5 + $0x70] sm:$0xff]
  %v369 = vld [vmem:[%s5 + $0x78] sm:$0xff]
  %v386 = vunpack.c.l.b16 %v354
  %v387 = vunpack.c.h.b16 %v354
  %v388 = vunpack.c.l.b16 %v355
  %v389 = vunpack.c.h.b16 %v355
  %v390 = vunpack.c.l.b16 %v356
  %v391 = vunpack.c.h.b16 %v356
  %v392 = vunpack.c.l.b16 %v357
  %v393 = vunpack.c.h.b16 %v357
  %v394 = vunpack.c.l.b16 %v358
  %v395 = vunpack.c.h.b16 %v358
  %v396 = vunpack.c.l.b16 %v359
  %v397 = vunpack.c.h.b16 %v359
  %v398 = vunpack.c.l.b16 %v360
  %v399 = vunpack.c.h.b16 %v360
  %v400 = vunpack.c.l.b16 %v361
  %v401 = vunpack.c.h.b16 %v361
  %v402 = vunpack.c.l.b16 %v362
  %v403 = vunpack.c.h.b16 %v362
  %v404 = vunpack.c.l.b16 %v363
  %v405 = vunpack.c.h.b16 %v363
  %v406 = vunpack.c.l.b16 %v364
  %v407 = vunpack.c.h.b16 %v364
  %v408 = vunpack.c.l.b16 %v365
  %v409 = vunpack.c.h.b16 %v365
  %v410 = vunpack.c.l.b16 %v366
  %v411 = vunpack.c.h.b16 %v366
  %v412 = vunpack.c.l.b16 %v367
  %v413 = vunpack.c.h.b16 %v367
  %v414 = vunpack.c.l.b16 %v368
  %v415 = vunpack.c.h.b16 %v368
  %v416 = vunpack.c.l.b16 %v369
  %v417 = vunpack.c.h.b16 %v369
  %v418 = vpack.c.b16 %v390, %v386
  %v419 = vpack.c.b16 %v391, %v387
  %v420 = vpack.c.b16 %v392, %v388
  %v421 = vpack.c.b16 %v393, %v389
  %v422 = vpack.c.b16 %v398, %v394
  %v423 = vpack.c.b16 %v399, %v395
  %v424 = vpack.c.b16 %v400, %v396
  %v425 = vpack.c.b16 %v401, %v397
  %v426 = vpack.c.b16 %v406, %v402
  %v427 = vpack.c.b16 %v407, %v403
  %v428 = vpack.c.b16 %v408, %v404
  %v429 = vpack.c.b16 %v409, %v405
  %v430 = vpack.c.b16 %v414, %v410
  %v431 = vpack.c.b16 %v415, %v411
  %v432 = vpack.c.b16 %v416, %v412
  %v433 = vpack.c.b16 %v417, %v413
  %vm450 = vcmask 523264
  %v452 = vsel %vm450, %v353, 0
  %454 = vmatprep.subr.bf16.mxu0 %v419
  %455 = vmatpush1.bf16.msra.mxu0 %v418
  %456 = vmatprep.subr.bf16.mxu0 %v423
  %457 = vmatpush1.bf16.msra.mxu0 %v422
  %458 = vmatprep.subr.bf16.mxu0 %v427
  %459 = vmatpush1.bf16.msra.mxu0 %v426
  %460 = vmatprep.subr.bf16.mxu0 %v431
  %461 = vmatpush1.bf16.msra.mxu0 %v430
  %462 = vmatprep.subr.bf16.mxu0 0
  %463 = vmatpush1.bf16.msra.mxu0 0
  %464 = vmatprep.subr.bf16.mxu0 0
  %465 = vmatpush1.bf16.msra.mxu0 0
  %466 = vmatprep.subr.bf16.mxu0 0
  %467 = vmatpush1.bf16.msra.mxu0 0
  %468 = vmatprep.subr.bf16.mxu0 0
  %469 = vmatpush1.bf16.msra.mxu0 0
  %470 = vmatprep.subr.bf16.mxu0 0
  %471 = vmatpush1.bf16.msra.mxu0 0
  %472 = vmatprep.subr.bf16.mxu0 0
  %473 = vmatpush1.bf16.msra.mxu0 0
  %474 = vmatprep.subr.bf16.mxu0 0
  %475 = vmatpush1.bf16.msra.mxu0 0
  %476 = vmatprep.subr.bf16.mxu0 0
  %477 = vmatpush1.bf16.msra.mxu0 0
  %478 = vmatprep.subr.bf16.mxu0 0
  %479 = vmatpush1.bf16.msra.mxu0 0
  %480 = vmatprep.subr.bf16.mxu0 0
  %481 = vmatpush1.bf16.msra.mxu0 0
  %482 = vmatprep.subr.bf16.mxu0 0
  %483 = vmatpush1.bf16.msra.mxu0 0
  %484 = vmatprep.subr.bf16.mxu0 0
  %485 = vmatpush1.bf16.msra.mxu0 0
  %486 = vmatprep.mubr.bf16.mxu0 0
  %487 = vmatmul.mubr.bf16.gmra.mrb[0].mxu0 %v452
  %v488 = vpop.f32.mrb[0].mxu0
  %v489 = vadd.f32 0.0, %v488
  %v490 = vpop.f32.mrb[0].mxu0
  %v491 = vadd.f32 0.0, %v490
  %v492 = vpop.f32.mrb[0].mxu0
  %v493 = vpop.f32.mrb[0].mxu0
  %494 = vdwg.mxu0
  %495 = vmatprep.subr.bf16.mxu0 %v421
  %496 = vmatpush1.bf16.msra.mxu0 %v420
  %497 = vmatprep.subr.bf16.mxu0 %v425
  %498 = vmatpush1.bf16.msra.mxu0 %v424
  %499 = vmatprep.subr.bf16.mxu0 %v429
  %500 = vmatpush1.bf16.msra.mxu0 %v428
  %501 = vmatprep.subr.bf16.mxu0 %v433
  %502 = vmatpush1.bf16.msra.mxu0 %v432
  %503 = vmatprep.subr.bf16.mxu0 0
  %504 = vmatpush1.bf16.msra.mxu0 0
  %505 = vmatprep.subr.bf16.mxu0 0
  %506 = vmatpush1.bf16.msra.mxu0 0
  %507 = vmatprep.subr.bf16.mxu0 0
  %508 = vmatpush1.bf16.msra.mxu0 0
  %509 = vmatprep.subr.bf16.mxu0 0
  %510 = vmatpush1.bf16.msra.mxu0 0
  %511 = vmatprep.subr.bf16.mxu0 0
  %512 = vmatpush1.bf16.msra.mxu0 0
  %513 = vmatprep.subr.bf16.mxu0 0
  %514 = vmatpush1.bf16.msra.mxu0 0
  %515 = vmatprep.subr.bf16.mxu0 0
  %516 = vmatpush1.bf16.msra.mxu0 0
  %517 = vmatprep.subr.bf16.mxu0 0
  %518 = vmatpush1.bf16.msra.mxu0 0
  %519 = vmatprep.subr.bf16.mxu0 0
  %520 = vmatpush1.bf16.msra.mxu0 0
  %521 = vmatprep.subr.bf16.mxu0 0
  %522 = vmatpush1.bf16.msra.mxu0 0
  %523 = vmatprep.subr.bf16.mxu0 0
  %524 = vmatpush1.bf16.msra.mxu0 0
  %525 = vmatprep.subr.bf16.mxu0 0
  %526 = vmatpush1.bf16.msra.mxu0 0
  %527 = vmatprep.mubr.bf16.mxu0 0
  %528 = vmatmul.mubr.bf16.gmra.mrb[0].mxu0 %v452
  %v529 = vpop.f32.mrb[0].mxu0
  %v530 = vadd.f32 0.0, %v529
  %v531 = vpop.f32.mrb[0].mxu0
  %v532 = vadd.f32 0.0, %v531
  %v533 = vpop.f32.mrb[0].mxu0
  %v534 = vpop.f32.mrb[0].mxu0
  %535 = vdwg.mxu0
  %v536 = vxor.u32 %v489, 2147483648
  %v537 = vxor.u32 %v491, 2147483648
  %v538 = vxor.u32 %v530, 2147483648
  %v539 = vxor.u32 %v532, 2147483648
  %v540 = vmul.f32 %v536, 1.442695
  %v541 = vpow.pop %v540
  %v542 = vmul.f32 %v537, 1.442695
  %v543 = vpow.pop %v542
  %v544 = vmul.f32 %v538, 1.442695
  %v545 = vpow.pop %v544
  %v546 = vmul.f32 %v539, 1.442695
  %v547 = vpow.pop %v546
  %v548 = vadd.f32 %v541, 1.0
  %v549 = vadd.f32 %v543, 1.0
  %v550 = vadd.f32 %v545, 1.0
  %v551 = vadd.f32 %v547, 1.0
  %v552 = vrcp.pop %v548
  %v553 = vmul.f32 1.0, %v552
  %v554 = vrcp.pop %v549
  %v555 = vmul.f32 1.0, %v554
  %v556 = vrcp.pop %v550
  %v557 = vmul.f32 1.0, %v556
  %v558 = vrcp.pop %v551
  %v559 = vmul.f32 1.0, %v558
  %v560 = vld [vmem:[%s6] sm:$0xff]
  %v561 = vld [vmem:[%s6 + $0x8] sm:$0xff]
  %v562 = vld [vmem:[%s6 + $0x10] sm:$0xff]
  %v563 = vld [vmem:[%s6 + $0x18] sm:$0xff]
  %v564 = vld [vmem:[%s6 + $0x20] sm:$0xff]
  %v565 = vld [vmem:[%s6 + $0x28] sm:$0xff]
  %v566 = vld [vmem:[%s6 + $0x30] sm:$0xff]
  %v567 = vld [vmem:[%s6 + $0x38] sm:$0xff]
  %v568 = vld [vmem:[%s6 + $0x40] sm:$0xff]
  %v569 = vld [vmem:[%s6 + $0x48] sm:$0xff]
  %v570 = vld [vmem:[%s6 + $0x50] sm:$0xff]
  %v571 = vld [vmem:[%s6 + $0x58] sm:$0xff]
  %v572 = vld [vmem:[%s6 + $0x60] sm:$0xff]
  %v573 = vld [vmem:[%s6 + $0x68] sm:$0xff]
  %v574 = vld [vmem:[%s6 + $0x70] sm:$0xff]
  %v575 = vld [vmem:[%s6 + $0x78] sm:$0xff]
  %v592 = vunpack.c.l.b16 %v560
  %v593 = vunpack.c.h.b16 %v560
  %v594 = vunpack.c.l.b16 %v561
  %v595 = vunpack.c.h.b16 %v561
  %v596 = vunpack.c.l.b16 %v562
  %v597 = vunpack.c.h.b16 %v562
  %v598 = vunpack.c.l.b16 %v563
  %v599 = vunpack.c.h.b16 %v563
  %v600 = vunpack.c.l.b16 %v564
  %v601 = vunpack.c.h.b16 %v564
  %v602 = vunpack.c.l.b16 %v565
  %v603 = vunpack.c.h.b16 %v565
  %v604 = vunpack.c.l.b16 %v566
  %v605 = vunpack.c.h.b16 %v566
  %v606 = vunpack.c.l.b16 %v567
  %v607 = vunpack.c.h.b16 %v567
  %v608 = vunpack.c.l.b16 %v568
  %v609 = vunpack.c.h.b16 %v568
  %v610 = vunpack.c.l.b16 %v569
  %v611 = vunpack.c.h.b16 %v569
  %v612 = vunpack.c.l.b16 %v570
  %v613 = vunpack.c.h.b16 %v570
  %v614 = vunpack.c.l.b16 %v571
  %v615 = vunpack.c.h.b16 %v571
  %v616 = vunpack.c.l.b16 %v572
  %v617 = vunpack.c.h.b16 %v572
  %v618 = vunpack.c.l.b16 %v573
  %v619 = vunpack.c.h.b16 %v573
  %v620 = vunpack.c.l.b16 %v574
  %v621 = vunpack.c.h.b16 %v574
  %v622 = vunpack.c.l.b16 %v575
  %v623 = vunpack.c.h.b16 %v575
  %v624 = vpack.c.b16 %v596, %v592
  %v625 = vpack.c.b16 %v597, %v593
  %v626 = vpack.c.b16 %v598, %v594
  %v627 = vpack.c.b16 %v599, %v595
  %v628 = vpack.c.b16 %v604, %v600
  %v629 = vpack.c.b16 %v605, %v601
  %v630 = vpack.c.b16 %v606, %v602
  %v631 = vpack.c.b16 %v607, %v603
  %v632 = vpack.c.b16 %v612, %v608
  %v633 = vpack.c.b16 %v613, %v609
  %v634 = vpack.c.b16 %v614, %v610
  %v635 = vpack.c.b16 %v615, %v611
  %v636 = vpack.c.b16 %v620, %v616
  %v637 = vpack.c.b16 %v621, %v617
  %v638 = vpack.c.b16 %v622, %v618
  %v639 = vpack.c.b16 %v623, %v619
  %656 = vmatprep.subr.bf16.mxu0 %v625
  %657 = vmatpush1.bf16.msra.mxu0 %v624
  %658 = vmatprep.subr.bf16.mxu0 %v629
  %659 = vmatpush1.bf16.msra.mxu0 %v628
  %660 = vmatprep.subr.bf16.mxu0 %v633
  %661 = vmatpush1.bf16.msra.mxu0 %v632
  %662 = vmatprep.subr.bf16.mxu0 %v637
  %663 = vmatpush1.bf16.msra.mxu0 %v636
  %664 = vmatprep.subr.bf16.mxu0 0
  %665 = vmatpush1.bf16.msra.mxu0 0
  %666 = vmatprep.subr.bf16.mxu0 0
  %667 = vmatpush1.bf16.msra.mxu0 0
  %668 = vmatprep.subr.bf16.mxu0 0
  %669 = vmatpush1.bf16.msra.mxu0 0
  %670 = vmatprep.subr.bf16.mxu0 0
  %671 = vmatpush1.bf16.msra.mxu0 0
  %672 = vmatprep.subr.bf16.mxu0 0
  %673 = vmatpush1.bf16.msra.mxu0 0
  %674 = vmatprep.subr.bf16.mxu0 0
  %675 = vmatpush1.bf16.msra.mxu0 0
  %676 = vmatprep.subr.bf16.mxu0 0
  %677 = vmatpush1.bf16.msra.mxu0 0
  %678 = vmatprep.subr.bf16.mxu0 0
  %679 = vmatpush1.bf16.msra.mxu0 0
  %680 = vmatprep.subr.bf16.mxu0 0
  %681 = vmatpush1.bf16.msra.mxu0 0
  %682 = vmatprep.subr.bf16.mxu0 0
  %683 = vmatpush1.bf16.msra.mxu0 0
  %684 = vmatprep.subr.bf16.mxu0 0
  %685 = vmatpush1.bf16.msra.mxu0 0
  %686 = vmatprep.subr.bf16.mxu0 0
  %687 = vmatpush1.bf16.msra.mxu0 0
  %688 = vmatprep.mubr.bf16.mxu0 0
  %689 = vmatmul.mubr.bf16.gmra.mrb[0].mxu0 %v452
  %v690 = vpop.f32.mrb[0].mxu0
  %v691 = vadd.f32 0.0, %v690
  %v692 = vpop.f32.mrb[0].mxu0
  %v693 = vadd.f32 0.0, %v692
  %v694 = vpop.f32.mrb[0].mxu0
  %v695 = vpop.f32.mrb[0].mxu0
  %696 = vdwg.mxu0
  %697 = vmatprep.subr.bf16.mxu0 %v627
  %698 = vmatpush1.bf16.msra.mxu0 %v626
  %699 = vmatprep.subr.bf16.mxu0 %v631
  %700 = vmatpush1.bf16.msra.mxu0 %v630
  %701 = vmatprep.subr.bf16.mxu0 %v635
  %702 = vmatpush1.bf16.msra.mxu0 %v634
  %703 = vmatprep.subr.bf16.mxu0 %v639
  %704 = vmatpush1.bf16.msra.mxu0 %v638
  %705 = vmatprep.subr.bf16.mxu0 0
  %706 = vmatpush1.bf16.msra.mxu0 0
  %707 = vmatprep.subr.bf16.mxu0 0
  %708 = vmatpush1.bf16.msra.mxu0 0
  %709 = vmatprep.subr.bf16.mxu0 0
  %710 = vmatpush1.bf16.msra.mxu0 0
  %711 = vmatprep.subr.bf16.mxu0 0
  %712 = vmatpush1.bf16.msra.mxu0 0
  %713 = vmatprep.subr.bf16.mxu0 0
  %714 = vmatpush1.bf16.msra.mxu0 0
  %715 = vmatprep.subr.bf16.mxu0 0
  %716 = vmatpush1.bf16.msra.mxu0 0
  %717 = vmatprep.subr.bf16.mxu0 0
  %718 = vmatpush1.bf16.msra.mxu0 0
  %719 = vmatprep.subr.bf16.mxu0 0
  %720 = vmatpush1.bf16.msra.mxu0 0
  %721 = vmatprep.subr.bf16.mxu0 0
  %722 = vmatpush1.bf16.msra.mxu0 0
  %723 = vmatprep.subr.bf16.mxu0 0
  %724 = vmatpush1.bf16.msra.mxu0 0
  %725 = vmatprep.subr.bf16.mxu0 0
  %726 = vmatpush1.bf16.msra.mxu0 0
  %727 = vmatprep.subr.bf16.mxu0 0
  %728 = vmatpush1.bf16.msra.mxu0 0
  %729 = vmatprep.mubr.bf16.mxu0 0
  %730 = vmatmul.mubr.bf16.gmra.mrb[0].mxu0 %v452
  %v731 = vpop.f32.mrb[0].mxu0
  %v732 = vadd.f32 0.0, %v731
  %v733 = vpop.f32.mrb[0].mxu0
  %v734 = vadd.f32 0.0, %v733
  %v735 = vpop.f32.mrb[0].mxu0
  %v736 = vpop.f32.mrb[0].mxu0
  %737 = vdwg.mxu0
  %v738 = vmul.f32 %v553, 1.442695
  %v739 = vpow.pop %v738
  %v740 = vmul.f32 %v555, 1.442695
  %v741 = vpow.pop %v740
  %v742 = vmul.f32 %v557, 1.442695
  %v743 = vpow.pop %v742
  %v744 = vmul.f32 %v559, 1.442695
  %v745 = vpow.pop %v744
  %v747 = vcombine.high %v39, %v39
  %v749 = vunpack.c.l.s4 1983009808
  %v750 = vunpack.c.0.s8 %v749
  %v751 = vlaneseq
  %v752 = vshrl.u32 %v751, 7
  %v753 = vsub.s32 %v750, %v752
  %v754 = vrot.slane %v39, %v753
  %v756 = vunpack.c.l.s4 1983009808
  %v757 = vunpack.c.0.s8 %v756
  %v758 = vlaneseq
  %v759 = vshrl.u32 %v758, 7
  %v760 = vsub.s32 %v757, %v759
  %v761 = vrot.slane %v747, %v760
  %v762 = vcombine.high %v754, %v754
  %v763 = vcombine.high %v761, %v761
  %v768 = vmul.f32 %v739, %v754
  %v769 = vmul.f32 %v741, %v762
  %v770 = vmul.f32 %v743, %v761
  %v771 = vmul.f32 %v745, %v763
  %v772 = vadd.f32 %v768, %v691
  %v773 = vadd.f32 %v769, %v693
  %v774 = vadd.f32 %v770, %v732
  %v775 = vadd.f32 %v771, %v734
  %vm776 = vcmask 1041408
  %v777 = vsel %vm776, %v553, 0.0
  %v778 = vsel %vm776, %v555, 0.0
  %v779 = vadd.f32 %v777, %v778
  %v780 = vsel %vm776, %v557, 0.0
  %v781 = vadd.f32 %v779, %v780
  %vm782 = vcmask 58368
  %v783 = vsel %vm782, %v559, 0.0
  %v784 = vadd.f32 %v781, %v783
  %785 = vadd.xlane.f32.xlu0 %v784
  %v786 = vpop.xlane.xlu0 %785
  %v787 = vpack.c.bf16 %v772, %v772
  %v788 = vpack.c.bf16 %v773, %v773
  %v789 = vpack.c.bf16 %v774, %v774
  %v790 = vpack.c.bf16 %v775, %v775
  %v791 = vld [vmem:[%s7] sm:$0xf]
  %v792 = vld [vmem:[%s7 + $0x4] sm:$0xf]
  %v793 = vld [vmem:[%s7 + $0x8] sm:$0xf]
  %v794 = vld [vmem:[%s7 + $0xc] sm:$0xf]
  %v795 = vld [vmem:[%s7 + $0x10] sm:$0xf]
  %v796 = vld [vmem:[%s7 + $0x14] sm:$0xf]
  %v797 = vld [vmem:[%s7 + $0x18] sm:$0xf]
  %v798 = vld [vmem:[%s7 + $0x1c] sm:$0xf]
  %v799 = vld [vmem:[%s7 + $0x20] sm:$0xf]
  %v800 = vld [vmem:[%s7 + $0x24] sm:$0xf]
  %v801 = vld [vmem:[%s7 + $0x28] sm:$0xf]
  %v802 = vld [vmem:[%s7 + $0x2c] sm:$0xf]
  %v803 = vld [vmem:[%s7 + $0x30] sm:$0xf]
  %v804 = vld [vmem:[%s7 + $0x34] sm:$0xf]
  %v805 = vld [vmem:[%s7 + $0x38] sm:$0xf]
  %v806 = vld [vmem:[%s7 + $0x3c] sm:$0xf]
  %v807 = vld [vmem:[%s7 + $0x40] sm:$0xf]
  %v808 = vld [vmem:[%s7 + $0x44] sm:$0xf]
  %v809 = vld [vmem:[%s7 + $0x48] sm:$0xf]
  %v810 = vld [vmem:[%s7 + $0x4c] sm:$0xf]
  %v811 = vld [vmem:[%s7 + $0x50] sm:$0xf]
  %v812 = vld [vmem:[%s7 + $0x54] sm:$0xf]
  %v813 = vld [vmem:[%s7 + $0x58] sm:$0xf]
  %v814 = vld [vmem:[%s7 + $0x5c] sm:$0xf]
  %v815 = vld [vmem:[%s7 + $0x60] sm:$0xf]
  %v816 = vld [vmem:[%s7 + $0x64] sm:$0xf]
  %v817 = vld [vmem:[%s7 + $0x68] sm:$0xf]
  %v818 = vld [vmem:[%s7 + $0x6c] sm:$0xf]
  %v819 = vld [vmem:[%s7 + $0x70] sm:$0xf]
  %v820 = vld [vmem:[%s7 + $0x74] sm:$0xf]
  %v821 = vld [vmem:[%s7 + $0x78] sm:$0xf]
  %v822 = vld [vmem:[%s7 + $0x7c] sm:$0xf]
  %v823 = vld [vmem:[%s7 + $0x80] sm:$0xf]
  %v824 = vld [vmem:[%s7 + $0x84] sm:$0xf]
  %v825 = vld [vmem:[%s7 + $0x88] sm:$0xf]
  %v826 = vld [vmem:[%s7 + $0x8c] sm:$0xf]
  %v827 = vld [vmem:[%s7 + $0x90] sm:$0xf]
  %v828 = vld [vmem:[%s7 + $0x94] sm:$0xf]
  %v829 = vld [vmem:[%s7 + $0x98] sm:$0xf]
  %v830 = vld [vmem:[%s7 + $0x9c] sm:$0xf]
  %v831 = vld [vmem:[%s7 + $0xa0] sm:$0xf]
  %v832 = vld [vmem:[%s7 + $0xa4] sm:$0xf]
  %v833 = vld [vmem:[%s7 + $0xa8] sm:$0xf]
  %v834 = vld [vmem:[%s7 + $0xac] sm:$0xf]
  %v835 = vld [vmem:[%s7 + $0xb0] sm:$0xf]
  %v836 = vld [vmem:[%s7 + $0xb4] sm:$0xf]
  %v837 = vld [vmem:[%s7 + $0xb8] sm:$0xf]
  %v838 = vld [vmem:[%s7 + $0xbc] sm:$0xf]
  %v839 = vld [vmem:[%s7 + $0xc0] sm:$0xf]
  %v840 = vld [vmem:[%s3] sm:$0x3]
  %v890 = vunpack.c.l.b16 %v791
  %v891 = vunpack.c.l.b16 %v792
  %v892 = vunpack.c.l.b16 %v793
  %v893 = vunpack.c.l.b16 %v794
  %v894 = vunpack.c.l.b16 %v795
  %v895 = vunpack.c.l.b16 %v796
  %v896 = vunpack.c.l.b16 %v797
  %v897 = vunpack.c.l.b16 %v798
  %v898 = vunpack.c.l.b16 %v799
  %v899 = vunpack.c.l.b16 %v800
  %v900 = vunpack.c.l.b16 %v801
  %v901 = vunpack.c.l.b16 %v802
  %v902 = vunpack.c.l.b16 %v803
  %v903 = vunpack.c.l.b16 %v804
  %v904 = vunpack.c.l.b16 %v805
  %v905 = vunpack.c.l.b16 %v806
  %v906 = vunpack.c.l.b16 %v807
  %v907 = vunpack.c.l.b16 %v808
  %v908 = vunpack.c.l.b16 %v809
  %v909 = vunpack.c.l.b16 %v810
  %v910 = vunpack.c.l.b16 %v811
  %v911 = vunpack.c.l.b16 %v812
  %v912 = vunpack.c.l.b16 %v813
  %v913 = vunpack.c.l.b16 %v814
  %v914 = vunpack.c.l.b16 %v815
  %v915 = vunpack.c.l.b16 %v816
  %v916 = vunpack.c.l.b16 %v817
  %v917 = vunpack.c.l.b16 %v818
  %v918 = vunpack.c.l.b16 %v819
  %v919 = vunpack.c.l.b16 %v820
  %v920 = vunpack.c.l.b16 %v821
  %v921 = vunpack.c.l.b16 %v822
  %v922 = vunpack.c.l.b16 %v823
  %v923 = vunpack.c.l.b16 %v824
  %v924 = vunpack.c.l.b16 %v825
  %v925 = vunpack.c.l.b16 %v826
  %v926 = vunpack.c.l.b16 %v827
  %v927 = vunpack.c.l.b16 %v828
  %v928 = vunpack.c.l.b16 %v829
  %v929 = vunpack.c.l.b16 %v830
  %v930 = vunpack.c.l.b16 %v831
  %v931 = vunpack.c.l.b16 %v832
  %v932 = vunpack.c.l.b16 %v833
  %v933 = vunpack.c.l.b16 %v834
  %v934 = vunpack.c.l.b16 %v835
  %v935 = vunpack.c.l.b16 %v836
  %v936 = vunpack.c.l.b16 %v837
  %v937 = vunpack.c.l.b16 %v838
  %v938 = vunpack.c.l.b16 %v839
  %v939 = vpack.c.b16 %v891, %v890
  %v940 = vpack.c.b16 %v893, %v892
  %v941 = vpack.c.b16 %v895, %v894
  %v942 = vpack.c.b16 %v897, %v896
  %v943 = vpack.c.b16 %v899, %v898
  %v944 = vpack.c.b16 %v901, %v900
  %v945 = vpack.c.b16 %v903, %v902
  %v946 = vpack.c.b16 %v905, %v904
  %v947 = vpack.c.b16 %v907, %v906
  %v948 = vpack.c.b16 %v909, %v908
  %v949 = vpack.c.b16 %v911, %v910
  %v950 = vpack.c.b16 %v913, %v912
  %v951 = vpack.c.b16 %v915, %v914
  %v952 = vpack.c.b16 %v917, %v916
  %v953 = vpack.c.b16 %v919, %v918
  %v954 = vpack.c.b16 %v921, %v920
  %v955 = vpack.c.b16 %v923, %v922
  %v956 = vpack.c.b16 %v925, %v924
  %v957 = vpack.c.b16 %v927, %v926
  %v958 = vpack.c.b16 %v929, %v928
  %v959 = vpack.c.b16 %v931, %v930
  %v960 = vpack.c.b16 %v933, %v932
  %v961 = vpack.c.b16 %v935, %v934
  %v962 = vpack.c.b16 %v937, %v936
  %v963 = vpack.c.b16 %v938, %v938
  %v989 = vsel %vm264, %v790, 0
  %v992 = vsel %vm268, %v963, 0
  %994 = vmatprep.subr.bf16.mxu0 0
  %995 = vmatpush1.bf16.msra.mxu0 %v939
  %996 = vmatprep.subr.bf16.mxu0 0
  %997 = vmatpush1.bf16.msra.mxu0 %v940
  %998 = vmatprep.subr.bf16.mxu0 0
  %999 = vmatpush1.bf16.msra.mxu0 %v941
  %1000 = vmatprep.subr.bf16.mxu0 0
  %1001 = vmatpush1.bf16.msra.mxu0 %v942
  %1002 = vmatprep.subr.bf16.mxu0 0
  %1003 = vmatpush1.bf16.msra.mxu0 %v943
  %1004 = vmatprep.subr.bf16.mxu0 0
  %1005 = vmatpush1.bf16.msra.mxu0 %v944
  %1006 = vmatprep.subr.bf16.mxu0 0
  %1007 = vmatpush1.bf16.msra.mxu0 %v945
  %1008 = vmatprep.subr.bf16.mxu0 0
  %1009 = vmatpush1.bf16.msra.mxu0 %v946
  %1010 = vmatprep.subr.bf16.mxu0 0
  %1011 = vmatpush1.bf16.msra.mxu0 %v947
  %1012 = vmatprep.subr.bf16.mxu0 0
  %1013 = vmatpush1.bf16.msra.mxu0 %v948
  %1014 = vmatprep.subr.bf16.mxu0 0
  %1015 = vmatpush1.bf16.msra.mxu0 %v949
  %1016 = vmatprep.subr.bf16.mxu0 0
  %1017 = vmatpush1.bf16.msra.mxu0 %v950
  %1018 = vmatprep.subr.bf16.mxu0 0
  %1019 = vmatpush1.bf16.msra.mxu0 %v951
  %1020 = vmatprep.subr.bf16.mxu0 0
  %1021 = vmatpush1.bf16.msra.mxu0 %v952
  %1022 = vmatprep.subr.bf16.mxu0 0
  %1023 = vmatpush1.bf16.msra.mxu0 %v953
  %1024 = vmatprep.subr.bf16.mxu0 0
  %1025 = vmatpush1.bf16.msra.mxu0 %v954
  %1026 = vmatprep.mubr.bf16.mxu0 %v788
  %1027 = vmatmul.mubr.bf16.gmra.mrb[0].mxu0 %v787
  %v1028 = vpop.f32.mrb[0].mxu0
  %v1029 = vadd.f32 %v840, %v1028
  %v1030 = vpop.f32.mrb[0].mxu0
  %v1031 = vpop.f32.mrb[0].mxu0
  %v1032 = vpop.f32.mrb[0].mxu0
  %1033 = vdwg.mxu0
  %1034 = vmatprep.subr.bf16.mxu0 0
  %1035 = vmatpush1.bf16.msra.mxu0 %v955
  %1036 = vmatprep.subr.bf16.mxu0 0
  %1037 = vmatpush1.bf16.msra.mxu0 %v956
  %1038 = vmatprep.subr.bf16.mxu0 0
  %1039 = vmatpush1.bf16.msra.mxu0 %v957
  %1040 = vmatprep.subr.bf16.mxu0 0
  %1041 = vmatpush1.bf16.msra.mxu0 %v958
  %1042 = vmatprep.subr.bf16.mxu0 0
  %1043 = vmatpush1.bf16.msra.mxu0 %v959
  %1044 = vmatprep.subr.bf16.mxu0 0
  %1045 = vmatpush1.bf16.msra.mxu0 %v960
  %1046 = vmatprep.subr.bf16.mxu0 0
  %1047 = vmatpush1.bf16.msra.mxu0 %v961
  %1048 = vmatprep.subr.bf16.mxu0 0
  %1049 = vmatpush1.bf16.msra.mxu0 %v962
  %1050 = vmatprep.subr.bf16.mxu0 0
  %1051 = vmatpush1.bf16.msra.mxu0 %v992
  %1052 = vmatprep.subr.bf16.mxu0 0
  %1053 = vmatpush1.bf16.msra.mxu0 0
  %1054 = vmatprep.subr.bf16.mxu0 0
  %1055 = vmatpush1.bf16.msra.mxu0 0
  %1056 = vmatprep.subr.bf16.mxu0 0
  %1057 = vmatpush1.bf16.msra.mxu0 0
  %1058 = vmatprep.subr.bf16.mxu0 0
  %1059 = vmatpush1.bf16.msra.mxu0 0
  %1060 = vmatprep.subr.bf16.mxu0 0
  %1061 = vmatpush1.bf16.msra.mxu0 0
  %1062 = vmatprep.subr.bf16.mxu0 0
  %1063 = vmatpush1.bf16.msra.mxu0 0
  %1064 = vmatprep.subr.bf16.mxu0 0
  %1065 = vmatpush1.bf16.msra.mxu0 0
  %1066 = vmatprep.mubr.bf16.mxu0 %v989
  %1067 = vmatmul.mubr.bf16.gmra.mrb[0].mxu0 %v789
  %v1068 = vpop.f32.mrb[0].mxu0
  %v1069 = vadd.f32 %v1029, %v1068
  %v1070 = vpop.f32.mrb[0].mxu0
  %v1071 = vpop.f32.mrb[0].mxu0
  %v1072 = vpop.f32.mrb[0].mxu0
  %1073 = vdwg.mxu0
  %v1074 = vmax.f32 %v1069, 0.0
  %v1075 = vpack.c.bf16 %v1074, %v1074
  %v1076 = vld [vmem:[%s8] sm:$0xff]
  %v1077 = vld [vmem:[%s8 + $0x8] sm:$0xff]
  %v1078 = vld [vmem:[%s8 + $0x10] sm:$0xff]
  %v1079 = vld [vmem:[%s8 + $0x18] sm:$0xff]
  %v1080 = vld [vmem:[%s8 + $0x20] sm:$0xff]
  %v1081 = vld [vmem:[%s8 + $0x28] sm:$0xff]
  %v1082 = vld [vmem:[%s8 + $0x30] sm:$0xff]
  %v1083 = vld [vmem:[%s8 + $0x38] sm:$0xff]
  %v1084 = vld [vmem:[%s8 + $0x40] sm:$0xff]
  %v1085 = vld [vmem:[%s8 + $0x48] sm:$0xff]
  %v1086 = vld [vmem:[%s8 + $0x50] sm:$0xff]
  %v1087 = vld [vmem:[%s8 + $0x58] sm:$0xff]
  %v1088 = vld [vmem:[%s8 + $0x60] sm:$0xff]
  %v1089 = vld [vmem:[%s8 + $0x68] sm:$0xff]
  %v1090 = vld [vmem:[%s8 + $0x70] sm:$0xff]
  %v1091 = vld [vmem:[%s8 + $0x78] sm:$0xff]
  %v1108 = vunpack.c.l.b16 %v1076
  %v1109 = vunpack.c.h.b16 %v1076
  %v1110 = vunpack.c.l.b16 %v1077
  %v1111 = vunpack.c.h.b16 %v1077
  %v1112 = vunpack.c.l.b16 %v1078
  %v1113 = vunpack.c.h.b16 %v1078
  %v1114 = vunpack.c.l.b16 %v1079
  %v1115 = vunpack.c.h.b16 %v1079
  %v1116 = vunpack.c.l.b16 %v1080
  %v1117 = vunpack.c.h.b16 %v1080
  %v1118 = vunpack.c.l.b16 %v1081
  %v1119 = vunpack.c.h.b16 %v1081
  %v1120 = vunpack.c.l.b16 %v1082
  %v1121 = vunpack.c.h.b16 %v1082
  %v1122 = vunpack.c.l.b16 %v1083
  %v1123 = vunpack.c.h.b16 %v1083
  %v1124 = vunpack.c.l.b16 %v1084
  %v1125 = vunpack.c.h.b16 %v1084
  %v1126 = vunpack.c.l.b16 %v1085
  %v1127 = vunpack.c.h.b16 %v1085
  %v1128 = vunpack.c.l.b16 %v1086
  %v1129 = vunpack.c.h.b16 %v1086
  %v1130 = vunpack.c.l.b16 %v1087
  %v1131 = vunpack.c.h.b16 %v1087
  %v1132 = vunpack.c.l.b16 %v1088
  %v1133 = vunpack.c.h.b16 %v1088
  %v1134 = vunpack.c.l.b16 %v1089
  %v1135 = vunpack.c.h.b16 %v1089
  %v1136 = vunpack.c.l.b16 %v1090
  %v1137 = vunpack.c.h.b16 %v1090
  %v1138 = vunpack.c.l.b16 %v1091
  %v1139 = vunpack.c.h.b16 %v1091
  %v1140 = vpack.c.b16 %v1112, %v1108
  %v1141 = vpack.c.b16 %v1113, %v1109
  %v1142 = vpack.c.b16 %v1114, %v1110
  %v1143 = vpack.c.b16 %v1115, %v1111
  %v1144 = vpack.c.b16 %v1120, %v1116
  %v1145 = vpack.c.b16 %v1121, %v1117
  %v1146 = vpack.c.b16 %v1122, %v1118
  %v1147 = vpack.c.b16 %v1123, %v1119
  %v1148 = vpack.c.b16 %v1128, %v1124
  %v1149 = vpack.c.b16 %v1129, %v1125
  %v1150 = vpack.c.b16 %v1130, %v1126
  %v1151 = vpack.c.b16 %v1131, %v1127
  %v1152 = vpack.c.b16 %v1136, %v1132
  %v1153 = vpack.c.b16 %v1137, %v1133
  %v1154 = vpack.c.b16 %v1138, %v1134
  %v1155 = vpack.c.b16 %v1139, %v1135
  %v1173 = vsel %vm450, %v1075, 0
  %1175 = vmatprep.subr.bf16.mxu0 %v1141
  %1176 = vmatpush1.bf16.msra.mxu0 %v1140
  %1177 = vmatprep.subr.bf16.mxu0 %v1145
  %1178 = vmatpush1.bf16.msra.mxu0 %v1144
  %1179 = vmatprep.subr.bf16.mxu0 %v1149
  %1180 = vmatpush1.bf16.msra.mxu0 %v1148
  %1181 = vmatprep.subr.bf16.mxu0 %v1153
  %1182 = vmatpush1.bf16.msra.mxu0 %v1152
  %1183 = vmatprep.subr.bf16.mxu0 0
  %1184 = vmatpush1.bf16.msra.mxu0 0
  %1185 = vmatprep.subr.bf16.mxu0 0
  %1186 = vmatpush1.bf16.msra.mxu0 0
  %1187 = vmatprep.subr.bf16.mxu0 0
  %1188 = vmatpush1.bf16.msra.mxu0 0
  %1189 = vmatprep.subr.bf16.mxu0 0
  %1190 = vmatpush1.bf16.msra.mxu0 0
  %1191 = vmatprep.subr.bf16.mxu0 0
  %1192 = vmatpush1.bf16.msra.mxu0 0
  %1193 = vmatprep.subr.bf16.mxu0 0
  %1194 = vmatpush1.bf16.msra.mxu0 0
  %1195 = vmatprep.subr.bf16.mxu0 0
  %1196 = vmatpush1.bf16.msra.mxu0 0
  %1197 = vmatprep.subr.bf16.mxu0 0
  %1198 = vmatpush1.bf16.msra.mxu0 0
  %1199 = vmatprep.subr.bf16.mxu0 0
  %1200 = vmatpush1.bf16.msra.mxu0 0
  %1201 = vmatprep.subr.bf16.mxu0 0
  %1202 = vmatpush1.bf16.msra.mxu0 0
  %1203 = vmatprep.subr.bf16.mxu0 0
  %1204 = vmatpush1.bf16.msra.mxu0 0
  %1205 = vmatprep.subr.bf16.mxu0 0
  %1206 = vmatpush1.bf16.msra.mxu0 0
  %1207 = vmatprep.mubr.bf16.mxu0 0
  %1208 = vmatmul.mubr.bf16.gmra.mrb[0].mxu0 %v1173
  %v1209 = vpop.f32.mrb[0].mxu0
  %v1210 = vadd.f32 0.0, %v1209
  %v1211 = vpop.f32.mrb[0].mxu0
  %v1212 = vadd.f32 0.0, %v1211
  %v1213 = vpop.f32.mrb[0].mxu0
  %v1214 = vpop.f32.mrb[0].mxu0
  %1215 = vdwg.mxu0
  %1216 = vmatprep.subr.bf16.mxu0 %v1143
  %1217 = vmatpush1.bf16.msra.mxu0 %v1142
  %1218 = vmatprep.subr.bf16.mxu0 %v1147
  %1219 = vmatpush1.bf16.msra.mxu0 %v1146
  %1220 = vmatprep.subr.bf16.mxu0 %v1151
  %1221 = vmatpush1.bf16.msra.mxu0 %v1150
  %1222 = vmatprep.subr.bf16.mxu0 %v1155
  %1223 = vmatpush1.bf16.msra.mxu0 %v1154
  %1224 = vmatprep.subr.bf16.mxu0 0
  %1225 = vmatpush1.bf16.msra.mxu0 0
  %1226 = vmatprep.subr.bf16.mxu0 0
  %1227 = vmatpush1.bf16.msra.mxu0 0
  %1228 = vmatprep.subr.bf16.mxu0 0
  %1229 = vmatpush1.bf16.msra.mxu0 0
  %1230 = vmatprep.subr.bf16.mxu0 0
  %1231 = vmatpush1.bf16.msra.mxu0 0
  %1232 = vmatprep.subr.bf16.mxu0 0
  %1233 = vmatpush1.bf16.msra.mxu0 0
  %1234 = vmatprep.subr.bf16.mxu0 0
  %1235 = vmatpush1.bf16.msra.mxu0 0
  %1236 = vmatprep.subr.bf16.mxu0 0
  %1237 = vmatpush1.bf16.msra.mxu0 0
  %1238 = vmatprep.subr.bf16.mxu0 0
  %1239 = vmatpush1.bf16.msra.mxu0 0
  %1240 = vmatprep.subr.bf16.mxu0 0
  %1241 = vmatpush1.bf16.msra.mxu0 0
  %1242 = vmatprep.subr.bf16.mxu0 0
  %1243 = vmatpush1.bf16.msra.mxu0 0
  %1244 = vmatprep.subr.bf16.mxu0 0
  %1245 = vmatpush1.bf16.msra.mxu0 0
  %1246 = vmatprep.subr.bf16.mxu0 0
  %1247 = vmatpush1.bf16.msra.mxu0 0
  %1248 = vmatprep.mubr.bf16.mxu0 0
  %1249 = vmatmul.mubr.bf16.gmra.mrb[0].mxu0 %v1173
  %v1250 = vpop.f32.mrb[0].mxu0
  %v1251 = vadd.f32 0.0, %v1250
  %v1252 = vpop.f32.mrb[0].mxu0
  %v1253 = vadd.f32 0.0, %v1252
  %v1254 = vpop.f32.mrb[0].mxu0
  %v1255 = vpop.f32.mrb[0].mxu0
  %1256 = vdwg.mxu0
  %v1257 = vxor.u32 %v1210, 2147483648
  %v1258 = vxor.u32 %v1212, 2147483648
  %v1259 = vxor.u32 %v1251, 2147483648
  %v1260 = vxor.u32 %v1253, 2147483648
  %v1261 = vmul.f32 %v1257, 1.442695
  %v1262 = vpow.pop %v1261
  %v1263 = vmul.f32 %v1258, 1.442695
  %v1264 = vpow.pop %v1263
  %v1265 = vmul.f32 %v1259, 1.442695
  %v1266 = vpow.pop %v1265
  %v1267 = vmul.f32 %v1260, 1.442695
  %v1268 = vpow.pop %v1267
  %v1269 = vadd.f32 %v1262, 1.0
  %v1270 = vadd.f32 %v1264, 1.0
  %v1271 = vadd.f32 %v1266, 1.0
  %v1272 = vadd.f32 %v1268, 1.0
  %v1273 = vrcp.pop %v1269
  %v1274 = vmul.f32 1.0, %v1273
  %v1275 = vrcp.pop %v1270
  %v1276 = vmul.f32 1.0, %v1275
  %v1277 = vrcp.pop %v1271
  %v1278 = vmul.f32 1.0, %v1277
  %v1279 = vrcp.pop %v1272
  %v1280 = vmul.f32 1.0, %v1279
  %v1281 = vld [vmem:[%s9] sm:$0xff]
  %v1282 = vld [vmem:[%s9 + $0x8] sm:$0xff]
  %v1283 = vld [vmem:[%s9 + $0x10] sm:$0xff]
  %v1284 = vld [vmem:[%s9 + $0x18] sm:$0xff]
  %v1285 = vld [vmem:[%s9 + $0x20] sm:$0xff]
  %v1286 = vld [vmem:[%s9 + $0x28] sm:$0xff]
  %v1287 = vld [vmem:[%s9 + $0x30] sm:$0xff]
  %v1288 = vld [vmem:[%s9 + $0x38] sm:$0xff]
  %v1289 = vld [vmem:[%s9 + $0x40] sm:$0xff]
  %v1290 = vld [vmem:[%s9 + $0x48] sm:$0xff]
  %v1291 = vld [vmem:[%s9 + $0x50] sm:$0xff]
  %v1292 = vld [vmem:[%s9 + $0x58] sm:$0xff]
  %v1293 = vld [vmem:[%s9 + $0x60] sm:$0xff]
  %v1294 = vld [vmem:[%s9 + $0x68] sm:$0xff]
  %v1295 = vld [vmem:[%s9 + $0x70] sm:$0xff]
  %v1296 = vld [vmem:[%s9 + $0x78] sm:$0xff]
  %v1313 = vunpack.c.l.b16 %v1281
  %v1314 = vunpack.c.h.b16 %v1281
  %v1315 = vunpack.c.l.b16 %v1282
  %v1316 = vunpack.c.h.b16 %v1282
  %v1317 = vunpack.c.l.b16 %v1283
  %v1318 = vunpack.c.h.b16 %v1283
  %v1319 = vunpack.c.l.b16 %v1284
  %v1320 = vunpack.c.h.b16 %v1284
  %v1321 = vunpack.c.l.b16 %v1285
  %v1322 = vunpack.c.h.b16 %v1285
  %v1323 = vunpack.c.l.b16 %v1286
  %v1324 = vunpack.c.h.b16 %v1286
  %v1325 = vunpack.c.l.b16 %v1287
  %v1326 = vunpack.c.h.b16 %v1287
  %v1327 = vunpack.c.l.b16 %v1288
  %v1328 = vunpack.c.h.b16 %v1288
  %v1329 = vunpack.c.l.b16 %v1289
  %v1330 = vunpack.c.h.b16 %v1289
  %v1331 = vunpack.c.l.b16 %v1290
  %v1332 = vunpack.c.h.b16 %v1290
  %v1333 = vunpack.c.l.b16 %v1291
  %v1334 = vunpack.c.h.b16 %v1291
  %v1335 = vunpack.c.l.b16 %v1292
  %v1336 = vunpack.c.h.b16 %v1292
  %v1337 = vunpack.c.l.b16 %v1293
  %v1338 = vunpack.c.h.b16 %v1293
  %v1339 = vunpack.c.l.b16 %v1294
  %v1340 = vunpack.c.h.b16 %v1294
  %v1341 = vunpack.c.l.b16 %v1295
  %v1342 = vunpack.c.h.b16 %v1295
  %v1343 = vunpack.c.l.b16 %v1296
  %v1344 = vunpack.c.h.b16 %v1296
  %v1345 = vpack.c.b16 %v1317, %v1313
  %v1346 = vpack.c.b16 %v1318, %v1314
  %v1347 = vpack.c.b16 %v1319, %v1315
  %v1348 = vpack.c.b16 %v1320, %v1316
  %v1349 = vpack.c.b16 %v1325, %v1321
  %v1350 = vpack.c.b16 %v1326, %v1322
  %v1351 = vpack.c.b16 %v1327, %v1323
  %v1352 = vpack.c.b16 %v1328, %v1324
  %v1353 = vpack.c.b16 %v1333, %v1329
  %v1354 = vpack.c.b16 %v1334, %v1330
  %v1355 = vpack.c.b16 %v1335, %v1331
  %v1356 = vpack.c.b16 %v1336, %v1332
  %v1357 = vpack.c.b16 %v1341, %v1337
  %v1358 = vpack.c.b16 %v1342, %v1338
  %v1359 = vpack.c.b16 %v1343, %v1339
  %v1360 = vpack.c.b16 %v1344, %v1340
  %1377 = vmatprep.subr.bf16.mxu0 %v1346
  %1378 = vmatpush1.bf16.msra.mxu0 %v1345
  %1379 = vmatprep.subr.bf16.mxu0 %v1350
  %1380 = vmatpush1.bf16.msra.mxu0 %v1349
  %1381 = vmatprep.subr.bf16.mxu0 %v1354
  %1382 = vmatpush1.bf16.msra.mxu0 %v1353
  %1383 = vmatprep.subr.bf16.mxu0 %v1358
  %1384 = vmatpush1.bf16.msra.mxu0 %v1357
  %1385 = vmatprep.subr.bf16.mxu0 0
  %1386 = vmatpush1.bf16.msra.mxu0 0
  %1387 = vmatprep.subr.bf16.mxu0 0
  %1388 = vmatpush1.bf16.msra.mxu0 0
  %1389 = vmatprep.subr.bf16.mxu0 0
  %1390 = vmatpush1.bf16.msra.mxu0 0
  %1391 = vmatprep.subr.bf16.mxu0 0
  %1392 = vmatpush1.bf16.msra.mxu0 0
  %1393 = vmatprep.subr.bf16.mxu0 0
  %1394 = vmatpush1.bf16.msra.mxu0 0
  %1395 = vmatprep.subr.bf16.mxu0 0
  %1396 = vmatpush1.bf16.msra.mxu0 0
  %1397 = vmatprep.subr.bf16.mxu0 0
  %1398 = vmatpush1.bf16.msra.mxu0 0
  %1399 = vmatprep.subr.bf16.mxu0 0
  %1400 = vmatpush1.bf16.msra.mxu0 0
  %1401 = vmatprep.subr.bf16.mxu0 0
  %1402 = vmatpush1.bf16.msra.mxu0 0
  %1403 = vmatprep.subr.bf16.mxu0 0
  %1404 = vmatpush1.bf16.msra.mxu0 0
  %1405 = vmatprep.subr.bf16.mxu0 0
  %1406 = vmatpush1.bf16.msra.mxu0 0
  %1407 = vmatprep.subr.bf16.mxu0 0
  %1408 = vmatpush1.bf16.msra.mxu0 0
  %1409 = vmatprep.mubr.bf16.mxu0 0
  %1410 = vmatmul.mubr.bf16.gmra.mrb[0].mxu0 %v1173
  %v1411 = vpop.f32.mrb[0].mxu0
  %v1412 = vadd.f32 0.0, %v1411
  %v1413 = vpop.f32.mrb[0].mxu0
  %v1414 = vadd.f32 0.0, %v1413
  %v1415 = vpop.f32.mrb[0].mxu0
  %v1416 = vpop.f32.mrb[0].mxu0
  %1417 = vdwg.mxu0
  %1418 = vmatprep.subr.bf16.mxu0 %v1348
  %1419 = vmatpush1.bf16.msra.mxu0 %v1347
  %1420 = vmatprep.subr.bf16.mxu0 %v1352
  %1421 = vmatpush1.bf16.msra.mxu0 %v1351
  %1422 = vmatprep.subr.bf16.mxu0 %v1356
  %1423 = vmatpush1.bf16.msra.mxu0 %v1355
  %1424 = vmatprep.subr.bf16.mxu0 %v1360
  %1425 = vmatpush1.bf16.msra.mxu0 %v1359
  %1426 = vmatprep.subr.bf16.mxu0 0
  %1427 = vmatpush1.bf16.msra.mxu0 0
  %1428 = vmatprep.subr.bf16.mxu0 0
  %1429 = vmatpush1.bf16.msra.mxu0 0
  %1430 = vmatprep.subr.bf16.mxu0 0
  %1431 = vmatpush1.bf16.msra.mxu0 0
  %1432 = vmatprep.subr.bf16.mxu0 0
  %1433 = vmatpush1.bf16.msra.mxu0 0
  %1434 = vmatprep.subr.bf16.mxu0 0
  %1435 = vmatpush1.bf16.msra.mxu0 0
  %1436 = vmatprep.subr.bf16.mxu0 0
  %1437 = vmatpush1.bf16.msra.mxu0 0
  %1438 = vmatprep.subr.bf16.mxu0 0
  %1439 = vmatpush1.bf16.msra.mxu0 0
  %1440 = vmatprep.subr.bf16.mxu0 0
  %1441 = vmatpush1.bf16.msra.mxu0 0
  %1442 = vmatprep.subr.bf16.mxu0 0
  %1443 = vmatpush1.bf16.msra.mxu0 0
  %1444 = vmatprep.subr.bf16.mxu0 0
  %1445 = vmatpush1.bf16.msra.mxu0 0
  %1446 = vmatprep.subr.bf16.mxu0 0
  %1447 = vmatpush1.bf16.msra.mxu0 0
  %1448 = vmatprep.subr.bf16.mxu0 0
  %1449 = vmatpush1.bf16.msra.mxu0 0
  %1450 = vmatprep.mubr.bf16.mxu0 0
  %1451 = vmatmul.mubr.bf16.gmra.mrb[0].mxu0 %v1173
  %v1452 = vpop.f32.mrb[0].mxu0
  %v1453 = vadd.f32 0.0, %v1452
  %v1454 = vpop.f32.mrb[0].mxu0
  %v1455 = vadd.f32 0.0, %v1454
  %v1456 = vpop.f32.mrb[0].mxu0
  %v1457 = vpop.f32.mrb[0].mxu0
  %1458 = vdwg.mxu0
  %v1463 = vcombine.low %v772, %v773
  %v1464 = vcombine.low %v774, %v775
  %v1466 = vunpack.c.l.s4 1983009808
  %v1467 = vunpack.c.0.s8 %v1466
  %v1468 = vlaneseq
  %v1469 = vshrl.u32 %v1468, 7
  %v1470 = vsub.s32 %v1467, %v1469
  %v1471 = vrot.slane %v1463, %v1470
  %v1473 = vunpack.c.l.s4 1983009808
  %v1474 = vunpack.c.0.s8 %v1473
  %v1475 = vlaneseq
  %v1476 = vshrl.u32 %v1475, 7
  %v1477 = vsub.s32 %v1474, %v1476
  %v1478 = vrot.slane %v1464, %v1477
  %v1479 = vcombine.low %v1471, %v1478
  %vm1481 = vcmask 1043458
  %vm1482 = vmor %vm1481, %vm776
  %vm1483 = vcmask 1045508
  %vm1484 = vmor %vm1483, %vm1482
  %vm1485 = vcmask 64518
  %vm1486 = vmor %vm1485, %vm1484
  %1487 = vst.msk [vmem:[%s10] sm:$0xff] %vm1486, %v1479
  %v1488 = vmul.f32 %v1274, 1.442695
  %v1489 = vpow.pop %v1488
  %v1490 = vmul.f32 %v1276, 1.442695
  %v1491 = vpow.pop %v1490
  %v1492 = vmul.f32 %v1278, 1.442695
  %v1493 = vpow.pop %v1492
  %v1494 = vmul.f32 %v1280, 1.442695
  %v1495 = vpow.pop %v1494
  %v1496 = vmul.f32 %v1489, %v49
  %v1497 = vmul.f32 %v1491, %v57
  %v1498 = vmul.f32 %v1493, %v56
  %v1499 = vmul.f32 %v1495, %v58
  %v1500 = vadd.f32 %v1496, %v1412
  %v1501 = vadd.f32 %v1497, %v1414
  %v1502 = vadd.f32 %v1498, %v1453
  %v1503 = vadd.f32 %v1499, %v1455
  %v1508 = vcombine.low %v1500, %v1501
  %v1509 = vcombine.low %v1502, %v1503
  %v1511 = vunpack.c.l.s4 1983009808
  %v1512 = vunpack.c.0.s8 %v1511
  %v1513 = vlaneseq
  %v1514 = vshrl.u32 %v1513, 7
  %v1515 = vsub.s32 %v1512, %v1514
  %v1516 = vrot.slane %v1508, %v1515
  %v1518 = vunpack.c.l.s4 1983009808
  %v1519 = vunpack.c.0.s8 %v1518
  %v1520 = vlaneseq
  %v1521 = vshrl.u32 %v1520, 7
  %v1522 = vsub.s32 %v1519, %v1521
  %v1523 = vrot.slane %v1509, %v1522
  %v1524 = vcombine.low %v1516, %v1523
  %1526 = vst.msk [vmem:[%s11] sm:$0xff] %vm1486, %v1524
  %v1527 = vsel %vm776, %v1274, 0.0
  %v1528 = vsel %vm776, %v1276, 0.0
  %v1529 = vadd.f32 %v1527, %v1528
  %v1530 = vsel %vm776, %v1278, 0.0
  %v1531 = vadd.f32 %v1529, %v1530
  %v1532 = vsel %vm782, %v1280, 0.0
  %v1533 = vadd.f32 %v1531, %v1532
  %1534 = vadd.xlane.f32.xlu0 %v1533
  %v1535 = vpop.xlane.xlu0 %1534
  %v1536 = vadd.f32 %v786, %v1535
  %vm1537 = vcmask 1024
  %1538 = vst.msk [vmem:[%s12] sm:$0x3] %vm1537, %v1536
  // Predicated region
  $region42: #{_lambda_.4} parent=0 // pred_check
    _
  $region43: #{_lambda_.4} parent=0 // pred_check_branch
    %1540 = sbr.rel (0) target = $region45
  $region44: #{_lambda_.4} parent=0 // pred_region
    _
  $region45: #{_lambda_.4} parent=0 // pred_fallthru
    _
  // Predicated region
  $region46: #{_lambda_.4} parent=0 // pred_check
    _
  $region47: #{_lambda_.4} parent=0 // pred_check_branch
    %1542 = sbr.rel (0) target = $region49
  $region48: #{_lambda_.4} parent=0 // pred_region
    _
  $region49: #{_lambda_.4} parent=0 // pred_fallthru
    _
  // Predicated region
  $region50: #{_lambda_.4} parent=0 // pred_check
    _
  $region51: #{_lambda_.4} parent=0 // pred_check_branch
    %1544 = sbr.rel (0) target = $region53
  $region52: #{_lambda_.4} parent=0 // pred_region
    _
  $region53: #{_lambda_.4} parent=0 // pred_fallthru
    _
  // Predicated region
  $region54: #{_lambda_.4} parent=0 // pred_check
    _
  $region55: #{_lambda_.4} parent=0 // pred_check_branch
    %1546 = sbr.rel (0) target = $region57
  $region56: #{_lambda_.4} parent=0 // pred_region
    _
  $region57: #{_lambda_.4} parent=0 // pred_fallthru
    _
  // Predicated region
  $region58: #{_lambda_.4} parent=0 // pred_check
    _
  $region59: #{_lambda_.4} parent=0 // pred_check_branch
    %1548 = sbr.rel (0) target = $region61
  $region60: #{_lambda_.4} parent=0 // pred_region
    _
  $region61: #{_lambda_.4} parent=0 // pred_fallthru
    _
  // Predicated region
  $region62: #{_lambda_.4} parent=0 // pred_check
    _
  $region63: #{_lambda_.4} parent=0 // pred_check_branch
    %1550 = sbr.rel (0) target = $region65
  $region64: #{_lambda_.4} parent=0 // pred_region
    _
  $region65: #{_lambda_.4} parent=0 // pred_fallthru
    _

</llo_original>
